<compile_context>
chip_gen: v7x
topology: tpu7x:2x2x1
jax: 0.10.0
libtpu: 0.0.40
codegen_flags: <defaults>
</compile_context>

<pallas_src>
import functools
import numpy as np
import jax
import jax.numpy as jnp
from jax.experimental import pallas as pl
from jax.experimental.pallas import tpu as pltpu

# ----------------------------- configuration ---------------------------------
B, C, H, W = 2, 4, 16, 16          # NCHW image input shape
T = 8                              # diffusion steps
BETA_1, BETA_T = 1e-4, 0.02
NUM_CLASSES, NUM_CLASSES2 = 10, 5
GUIDANCE_W = 0.5                   # stored by the module but unused in forward()
BC, HW = B * C, H * W              # (8, 256) slab -> full sublane/lane packing


# ----------------------------- schedule (buffers) -----------------------------
def make_schedule(beta_1, beta_T, t_steps):
    # mirrors the torch .double() buffers; computed in float64, used as float32
    betas = np.linspace(beta_1, beta_T, t_steps, dtype=np.float64)
    alphas = 1.0 - betas
    alphas_bar = np.cumprod(alphas)
    alphas_bar_prev = np.concatenate([[1.0], alphas_bar])[:t_steps]
    coeff1 = np.sqrt(1.0 / alphas)
    coeff2 = coeff1 * (1.0 - alphas) / np.sqrt(1.0 - alphas_bar)
    posterior_var = betas * (1.0 - alphas_bar_prev) / (1.0 - alphas_bar)
    # var = cat([posterior_var[1:2], betas[1:]])  (as in p_mean_variance)
    var_sched = np.concatenate([posterior_var[1:2], betas[1:]])
    return coeff1, coeff2, var_sched


# ----------------------------- Pallas kernel ---------------------------------
def _make_sampler_kernel(t_steps, bc, c1, c2, sv):
    """Builds the fused reverse-diffusion kernel.

    c1 / c2 / sv are per-loop-step Python floats (loop step i == time_step T-1-i),
    baked into the kernel as immediates (the schedule is a compile-time constant).
    """

    def kernel(x0_ref, wbig_ref, bias_ref, noise_ref, out_ref):
        # x0_ref   : (BC, HW)      f32 VMEM  -- x_T, batch-folded slab (pure reshape of NCHW)
        # wbig_ref : (BC, BC, 1)   f32 VMEM  -- block-diagonal channel-mix weight columns
        # bias_ref : (T, BC, 1)    f32 VMEM  -- per-step, per-row model bias (embeddings)
        # noise_ref: (T-1, BC, HW) f32 VMEM  -- gaussian noise for steps with time_step > 0
        # out_ref  : (BC, HW)      f32 VMEM  -- x_0 result (HBM buffer aliased with x_T)
        x = x0_ref[...]                                    # (BC, HW) loop carry, stays in vregs

        # Hoist the per-source-row weight columns out of the T loop: each is a (BC, 1)
        # per-sublane-row scalar vector that the VPU lane-broadcasts for free.
        wcols = [wbig_ref[s] for s in range(bc)]

        # Fully unrolled reverse-time loop (T static); loop step i <-> time_step T-1-i.
        for i in range(t_steps):
            # mean = coeff1 * x - coeff2 * eps,
            #   eps = bias + sum_s Wbig[s, :] * x[s]   (synthetic 1x1 channel-mix model)
            # Fold -coeff2 into the accumulation so eps is never materialized; each x[s]
            # is a sublane broadcast of one slab row (no concat, no (1,N) scalar FMAs).
            acc = c1[i] * x - c2[i] * bias_ref[i]          # (BC,HW) - (BC,1) lane-broadcast
            for s in range(bc):
                xs = jnp.broadcast_to(x[s:s + 1, :], x.shape)   # sublane-broadcast row s
                acc = acc - (c2[i] * wcols[s]) * xs

            if i < t_steps - 1:
                # time_step > 0: x_{t-1} = mean + sqrt(var) * noise
                x = acc + sv[i] * noise_ref[i]
            else:
                # time_step == 0: noise = 0, then torch.clip(x_0, -1, 1)
                x = jnp.clip(acc, -1.0, 1.0)

        out_ref[...] = x

    return kernel


@functools.partial(jax.jit, static_argnames=("t_steps", "c1", "c2", "sv"))
def run_sampler(x0, wbig, bias, noise, *, t_steps, c1, c2, sv):
    bc, hw = x0.shape
    kernel = _make_sampler_kernel(t_steps, bc, c1, c2, sv)
    return pl.pallas_call(
        kernel,
        out_shape=jax.ShapeDtypeStruct((bc, hw), jnp.float32),
        in_specs=[pl.BlockSpec(memory_space=pltpu.MemorySpace.VMEM) for _ in range(4)],
        out_specs=pl.BlockSpec(memory_space=pltpu.MemorySpace.VMEM),
        input_output_aliases={0: 0},                       # reuse the x_T buffer for x_0
    )(x0, wbig, bias, noise)


# ----------------------------- full sampler loop ------------------------------
def gaussian_diffusion_sample(x_T, labels, label2, params, key):
    """forward(): Algorithm 2 — t = T-1 .. 0, fused into one kernel invocation."""
    # TODO(synk): the injected black-box `self.model` (a conditional UNet) has no clean
    # Pallas equivalent here; it is replaced by a deterministic synthetic eps-predictor
    #   eps = x @ W_mix + (time_emb[t] + label_emb[labels] + label2_emb[label2])
    # broadcast over spatial, matching the previous version's semantics.
    wmix, time_emb, label_emb, label2_emb = params
    b, c, h, w = x_T.shape
    bc, hw = b * c, h * w

    coeff1, coeff2, var_sched = make_schedule(BETA_1, BETA_T, T)
    steps = np.arange(T - 1, -1, -1)                       # reverse-time ordering
    c1 = tuple(float(v) for v in coeff1[steps])
    c2 = tuple(float(v) for v in coeff2[steps])
    sv = tuple(float(v) for v in np.sqrt(var_sched[steps]))

    # NCHW -> batch-folded, sublane/lane-packed slab (B*C, H*W): a pure reshape.
    x0 = x_T.reshape(bc, hw).astype(jnp.float32)

    # Block-diagonal expansion of the (C, C) channel-mix weight, pre-shaped so that
    # wbig[s] is the (BC, 1) per-row weight column for source row s:
    #   wbig[s, r, 0] = W[s % C, r % C] if s, r in the same batch else 0
    wbig = jnp.kron(jnp.eye(b, dtype=jnp.float32),
                    wmix.astype(jnp.float32))[:, :, None]           # (BC, BC, 1)

    # Per-step, per-row scalar bias (T, BC, 1): time_emb[t, c] + label embeddings.
    lab_row = (label_emb[labels] + label2_emb[label2]).reshape(bc)          # (BC,)
    time_row = jnp.tile(time_emb[jnp.asarray(steps)], (1, b))               # (T, BC)
    bias = (time_row + lab_row[None, :])[:, :, None].astype(jnp.float32)    # (T, BC, 1)

    # Gaussian noise for every step with time_step > 0, drawn once (no last-step noise).
    noise = jax.random.normal(key, (T - 1, bc, hw), dtype=jnp.float32)

    out = run_sampler(x0, wbig, bias, noise, t_steps=T, c1=c1, c2=c2, sv=sv)
    return out.reshape(b, c, h, w)                         # slab -> NCHW (pure reshape)


# ----------------------------------- main --------------------------------------
if __name__ == "__main__":
    key = jax.random.PRNGKey(0)
    k_x, k_w, k_t, k_l1, k_l2, k_lab1, k_lab2, k_noise = jax.random.split(key, 8)

    # deterministic synthetic model parameters
    wmix = 0.1 * jax.random.normal(k_w, (C, C), dtype=jnp.float32)
    time_emb = 0.1 * jax.random.normal(k_t, (T, C), dtype=jnp.float32)
    label_emb = 0.1 * jax.random.normal(k_l1, (NUM_CLASSES, C), dtype=jnp.float32)
    label2_emb = 0.1 * jax.random.normal(k_l2, (NUM_CLASSES2, C), dtype=jnp.float32)
    params = (wmix, time_emb, label_emb, label2_emb)

    # inputs: x_T ~ N(0, I) in NCHW, integer labels
    x_T = jax.random.normal(k_x, (B, C, H, W), dtype=jnp.float32)
    labels = jax.random.randint(k_lab1, (B,), 0, NUM_CLASSES)
    label2 = jax.random.randint(k_lab2, (B,), 0, NUM_CLASSES2)

    x_0 = gaussian_diffusion_sample(x_T, labels, label2, params, k_noise)
    x_0 = jax.block_until_ready(x_0)

    # mirrors the torch `assert torch.isnan(x_t).int().sum() == 0`
    assert int(jnp.isnan(x_0).sum()) == 0, "nan in tensor."
    assert x_0.shape == (B, C, H, W)
    assert float(jnp.max(jnp.abs(x_0))) <= 1.0 + 1e-6

    print("KERNEL_OK")
</pallas_src>

<mosaic_0001>
module attributes {stable_mosaic.version = 11 : i64} {
  func.func @kernel(%arg0: memref<8x256xf32, #tpu.memory_space<vmem>>, %arg1: memref<8x8x1xf32, #tpu.memory_space<vmem>>, %arg2: memref<8x8x1xf32, #tpu.memory_space<vmem>>, %arg3: memref<7x8x256xf32, #tpu.memory_space<vmem>>, %arg4: memref<8x256xf32, #tpu.memory_space<vmem>>) attributes {dimension_semantics = [], scalar_prefetch = 0 : i64, scratch_operands = 0 : i64, tpu.core_type = #tpu.core_type<tc>} {
    %c0 = arith.constant 0 : index
    %c0_0 = arith.constant 0 : index
    %0 = vector.load %arg0[%c0, %c0_0] : memref<8x256xf32, #tpu.memory_space<vmem>>, vector<8x256xf32>
    %c0_1 = arith.constant 0 : index
    %c0_2 = arith.constant 0 : index
    %c0_3 = arith.constant 0 : index
    %1 = vector.load %arg1[%c0_1, %c0_2, %c0_3] : memref<8x8x1xf32, #tpu.memory_space<vmem>>, vector<1x8x1xf32>
    %2 = vector.shape_cast %1 : vector<1x8x1xf32> to vector<8x1xf32>
    %c1 = arith.constant 1 : index
    %c0_4 = arith.constant 0 : index
    %c0_5 = arith.constant 0 : index
    %3 = vector.load %arg1[%c1, %c0_4, %c0_5] : memref<8x8x1xf32, #tpu.memory_space<vmem>>, vector<1x8x1xf32>
    %4 = vector.shape_cast %3 : vector<1x8x1xf32> to vector<8x1xf32>
    %c2 = arith.constant 2 : index
    %c0_6 = arith.constant 0 : index
    %c0_7 = arith.constant 0 : index
    %5 = vector.load %arg1[%c2, %c0_6, %c0_7] : memref<8x8x1xf32, #tpu.memory_space<vmem>>, vector<1x8x1xf32>
    %6 = vector.shape_cast %5 : vector<1x8x1xf32> to vector<8x1xf32>
    %c3 = arith.constant 3 : index
    %c0_8 = arith.constant 0 : index
    %c0_9 = arith.constant 0 : index
    %7 = vector.load %arg1[%c3, %c0_8, %c0_9] : memref<8x8x1xf32, #tpu.memory_space<vmem>>, vector<1x8x1xf32>
    %8 = vector.shape_cast %7 : vector<1x8x1xf32> to vector<8x1xf32>
    %c4 = arith.constant 4 : index
    %c0_10 = arith.constant 0 : index
    %c0_11 = arith.constant 0 : index
    %9 = vector.load %arg1[%c4, %c0_10, %c0_11] : memref<8x8x1xf32, #tpu.memory_space<vmem>>, vector<1x8x1xf32>
    %10 = vector.shape_cast %9 : vector<1x8x1xf32> to vector<8x1xf32>
    %c5 = arith.constant 5 : index
    %c0_12 = arith.constant 0 : index
    %c0_13 = arith.constant 0 : index
    %11 = vector.load %arg1[%c5, %c0_12, %c0_13] : memref<8x8x1xf32, #tpu.memory_space<vmem>>, vector<1x8x1xf32>
    %12 = vector.shape_cast %11 : vector<1x8x1xf32> to vector<8x1xf32>
    %c6 = arith.constant 6 : index
    %c0_14 = arith.constant 0 : index
    %c0_15 = arith.constant 0 : index
    %13 = vector.load %arg1[%c6, %c0_14, %c0_15] : memref<8x8x1xf32, #tpu.memory_space<vmem>>, vector<1x8x1xf32>
    %14 = vector.shape_cast %13 : vector<1x8x1xf32> to vector<8x1xf32>
    %c7 = arith.constant 7 : index
    %c0_16 = arith.constant 0 : index
    %c0_17 = arith.constant 0 : index
    %15 = vector.load %arg1[%c7, %c0_16, %c0_17] : memref<8x8x1xf32, #tpu.memory_space<vmem>>, vector<1x8x1xf32>
    %16 = vector.shape_cast %15 : vector<1x8x1xf32> to vector<8x1xf32>
    %cst = arith.constant 1.01015258 : f32
    %17 = vector.broadcast %cst : f32 to vector<8x256xf32>
    %18 = arith.mulf %17, %0 : vector<8x256xf32>
    %c0_18 = arith.constant 0 : index
    %c0_19 = arith.constant 0 : index
    %c0_20 = arith.constant 0 : index
    %19 = vector.load %arg2[%c0_18, %c0_19, %c0_20] : memref<8x8x1xf32, #tpu.memory_space<vmem>>, vector<1x8x1xf32>
    %20 = vector.shape_cast %19 : vector<1x8x1xf32> to vector<8x1xf32>
    %cst_21 = arith.constant 0.0724371299 : f32
    %21 = vector.broadcast %cst_21 : f32 to vector<8x1xf32>
    %22 = arith.mulf %21, %20 : vector<8x1xf32>
    %23 = vector.broadcast %22 : vector<8x1xf32> to vector<8x256xf32>
    %24 = arith.subf %18, %23 : vector<8x256xf32>
    %25 = vector.extract_strided_slice %0 {offsets = [0, 0], sizes = [1, 256], strides = [1, 1]} : vector<8x256xf32> to vector<1x256xf32>
    %26 = vector.shape_cast %25 : vector<1x256xf32> to vector<1x256xf32>
    %27 = vector.broadcast %26 : vector<1x256xf32> to vector<8x256xf32>
    %cst_22 = arith.constant 0.0724371299 : f32
    %28 = vector.broadcast %cst_22 : f32 to vector<8x1xf32>
    %29 = arith.mulf %28, %2 : vector<8x1xf32>
    %30 = vector.broadcast %29 : vector<8x1xf32> to vector<8x256xf32>
    %31 = arith.mulf %30, %27 : vector<8x256xf32>
    %32 = arith.subf %24, %31 : vector<8x256xf32>
    %33 = vector.extract_strided_slice %0 {offsets = [1, 0], sizes = [1, 256], strides = [1, 1]} : vector<8x256xf32> to vector<1x256xf32>
    %34 = vector.shape_cast %33 : vector<1x256xf32> to vector<1x256xf32>
    %35 = vector.broadcast %34 : vector<1x256xf32> to vector<8x256xf32>
    %cst_23 = arith.constant 0.0724371299 : f32
    %36 = vector.broadcast %cst_23 : f32 to vector<8x1xf32>
    %37 = arith.mulf %36, %4 : vector<8x1xf32>
    %38 = vector.broadcast %37 : vector<8x1xf32> to vector<8x256xf32>
    %39 = arith.mulf %38, %35 : vector<8x256xf32>
    %40 = arith.subf %32, %39 : vector<8x256xf32>
    %41 = vector.extract_strided_slice %0 {offsets = [2, 0], sizes = [1, 256], strides = [1, 1]} : vector<8x256xf32> to vector<1x256xf32>
    %42 = vector.shape_cast %41 : vector<1x256xf32> to vector<1x256xf32>
    %43 = vector.broadcast %42 : vector<1x256xf32> to vector<8x256xf32>
    %cst_24 = arith.constant 0.0724371299 : f32
    %44 = vector.broadcast %cst_24 : f32 to vector<8x1xf32>
    %45 = arith.mulf %44, %6 : vector<8x1xf32>
    %46 = vector.broadcast %45 : vector<8x1xf32> to vector<8x256xf32>
    %47 = arith.mulf %46, %43 : vector<8x256xf32>
    %48 = arith.subf %40, %47 : vector<8x256xf32>
    %49 = vector.extract_strided_slice %0 {offsets = [3, 0], sizes = [1, 256], strides = [1, 1]} : vector<8x256xf32> to vector<1x256xf32>
    %50 = vector.shape_cast %49 : vector<1x256xf32> to vector<1x256xf32>
    %51 = vector.broadcast %50 : vector<1x256xf32> to vector<8x256xf32>
    %cst_25 = arith.constant 0.0724371299 : f32
    %52 = vector.broadcast %cst_25 : f32 to vector<8x1xf32>
    %53 = arith.mulf %52, %8 : vector<8x1xf32>
    %54 = vector.broadcast %53 : vector<8x1xf32> to vector<8x256xf32>
    %55 = arith.mulf %54, %51 : vector<8x256xf32>
    %56 = arith.subf %48, %55 : vector<8x256xf32>
    %57 = vector.extract_strided_slice %0 {offsets = [4, 0], sizes = [1, 256], strides = [1, 1]} : vector<8x256xf32> to vector<1x256xf32>
    %58 = vector.shape_cast %57 : vector<1x256xf32> to vector<1x256xf32>
    %59 = vector.broadcast %58 : vector<1x256xf32> to vector<8x256xf32>
    %cst_26 = arith.constant 0.0724371299 : f32
    %60 = vector.broadcast %cst_26 : f32 to vector<8x1xf32>
    %61 = arith.mulf %60, %10 : vector<8x1xf32>
    %62 = vector.broadcast %61 : vector<8x1xf32> to vector<8x256xf32>
    %63 = arith.mulf %62, %59 : vector<8x256xf32>
    %64 = arith.subf %56, %63 : vector<8x256xf32>
    %65 = vector.extract_strided_slice %0 {offsets = [5, 0], sizes = [1, 256], strides = [1, 1]} : vector<8x256xf32> to vector<1x256xf32>
    %66 = vector.shape_cast %65 : vector<1x256xf32> to vector<1x256xf32>
    %67 = vector.broadcast %66 : vector<1x256xf32> to vector<8x256xf32>
    %cst_27 = arith.constant 0.0724371299 : f32
    %68 = vector.broadcast %cst_27 : f32 to vector<8x1xf32>
    %69 = arith.mulf %68, %12 : vector<8x1xf32>
    %70 = vector.broadcast %69 : vector<8x1xf32> to vector<8x256xf32>
    %71 = arith.mulf %70, %67 : vector<8x256xf32>
    %72 = arith.subf %64, %71 : vector<8x256xf32>
    %73 = vector.extract_strided_slice %0 {offsets = [6, 0], sizes = [1, 256], strides = [1, 1]} : vector<8x256xf32> to vector<1x256xf32>
    %74 = vector.shape_cast %73 : vector<1x256xf32> to vector<1x256xf32>
    %75 = vector.broadcast %74 : vector<1x256xf32> to vector<8x256xf32>
    %cst_28 = arith.constant 0.0724371299 : f32
    %76 = vector.broadcast %cst_28 : f32 to vector<8x1xf32>
    %77 = arith.mulf %76, %14 : vector<8x1xf32>
    %78 = vector.broadcast %77 : vector<8x1xf32> to vector<8x256xf32>
    %79 = arith.mulf %78, %75 : vector<8x256xf32>
    %80 = arith.subf %72, %79 : vector<8x256xf32>
    %81 = vector.extract_strided_slice %0 {offsets = [7, 0], sizes = [1, 256], strides = [1, 1]} : vector<8x256xf32> to vector<1x256xf32>
    %82 = vector.shape_cast %81 : vector<1x256xf32> to vector<1x256xf32>
    %83 = vector.broadcast %82 : vector<1x256xf32> to vector<8x256xf32>
    %cst_29 = arith.constant 0.0724371299 : f32
    %84 = vector.broadcast %cst_29 : f32 to vector<8x1xf32>
    %85 = arith.mulf %84, %16 : vector<8x1xf32>
    %86 = vector.broadcast %85 : vector<8x1xf32> to vector<8x256xf32>
    %87 = arith.mulf %86, %83 : vector<8x256xf32>
    %88 = arith.subf %80, %87 : vector<8x256xf32>
    %c0_30 = arith.constant 0 : index
    %c0_31 = arith.constant 0 : index
    %c0_32 = arith.constant 0 : index
    %89 = vector.load %arg3[%c0_30, %c0_31, %c0_32] : memref<7x8x256xf32, #tpu.memory_space<vmem>>, vector<1x8x256xf32>
    %90 = vector.shape_cast %89 : vector<1x8x256xf32> to vector<8x256xf32>
    %cst_33 = arith.constant 0.141421363 : f32
    %91 = vector.broadcast %cst_33 : f32 to vector<8x256xf32>
    %92 = arith.mulf %91, %90 : vector<8x256xf32>
    %93 = arith.addf %88, %92 : vector<8x256xf32>
    %cst_34 = arith.constant 1.0086906 : f32
    %94 = vector.broadcast %cst_34 : f32 to vector<8x256xf32>
    %95 = arith.mulf %94, %93 : vector<8x256xf32>
    %c1_35 = arith.constant 1 : index
    %c0_36 = arith.constant 0 : index
    %c0_37 = arith.constant 0 : index
    %96 = vector.load %arg2[%c1_35, %c0_36, %c0_37] : memref<8x8x1xf32, #tpu.memory_space<vmem>>, vector<1x8x1xf32>
    %97 = vector.shape_cast %96 : vector<1x8x1xf32> to vector<8x1xf32>
    %cst_38 = arith.constant 0.0712685436 : f32
    %98 = vector.broadcast %cst_38 : f32 to vector<8x1xf32>
    %99 = arith.mulf %98, %97 : vector<8x1xf32>
    %100 = vector.broadcast %99 : vector<8x1xf32> to vector<8x256xf32>
    %101 = arith.subf %95, %100 : vector<8x256xf32>
    %102 = vector.extract_strided_slice %93 {offsets = [0, 0], sizes = [1, 256], strides = [1, 1]} : vector<8x256xf32> to vector<1x256xf32>
    %103 = vector.shape_cast %102 : vector<1x256xf32> to vector<1x256xf32>
    %104 = vector.broadcast %103 : vector<1x256xf32> to vector<8x256xf32>
    %cst_39 = arith.constant 0.0712685436 : f32
    %105 = vector.broadcast %cst_39 : f32 to vector<8x1xf32>
    %106 = arith.mulf %105, %2 : vector<8x1xf32>
    %107 = vector.broadcast %106 : vector<8x1xf32> to vector<8x256xf32>
    %108 = arith.mulf %107, %104 : vector<8x256xf32>
    %109 = arith.subf %101, %108 : vector<8x256xf32>
    %110 = vector.extract_strided_slice %93 {offsets = [1, 0], sizes = [1, 256], strides = [1, 1]} : vector<8x256xf32> to vector<1x256xf32>
    %111 = vector.shape_cast %110 : vector<1x256xf32> to vector<1x256xf32>
    %112 = vector.broadcast %111 : vector<1x256xf32> to vector<8x256xf32>
    %cst_40 = arith.constant 0.0712685436 : f32
    %113 = vector.broadcast %cst_40 : f32 to vector<8x1xf32>
    %114 = arith.mulf %113, %4 : vector<8x1xf32>
    %115 = vector.broadcast %114 : vector<8x1xf32> to vector<8x256xf32>
    %116 = arith.mulf %115, %112 : vector<8x256xf32>
    %117 = arith.subf %109, %116 : vector<8x256xf32>
    %118 = vector.extract_strided_slice %93 {offsets = [2, 0], sizes = [1, 256], strides = [1, 1]} : vector<8x256xf32> to vector<1x256xf32>
    %119 = vector.shape_cast %118 : vector<1x256xf32> to vector<1x256xf32>
    %120 = vector.broadcast %119 : vector<1x256xf32> to vector<8x256xf32>
    %cst_41 = arith.constant 0.0712685436 : f32
    %121 = vector.broadcast %cst_41 : f32 to vector<8x1xf32>
    %122 = arith.mulf %121, %6 : vector<8x1xf32>
    %123 = vector.broadcast %122 : vector<8x1xf32> to vector<8x256xf32>
    %124 = arith.mulf %123, %120 : vector<8x256xf32>
    %125 = arith.subf %117, %124 : vector<8x256xf32>
    %126 = vector.extract_strided_slice %93 {offsets = [3, 0], sizes = [1, 256], strides = [1, 1]} : vector<8x256xf32> to vector<1x256xf32>
    %127 = vector.shape_cast %126 : vector<1x256xf32> to vector<1x256xf32>
    %128 = vector.broadcast %127 : vector<1x256xf32> to vector<8x256xf32>
    %cst_42 = arith.constant 0.0712685436 : f32
    %129 = vector.broadcast %cst_42 : f32 to vector<8x1xf32>
    %130 = arith.mulf %129, %8 : vector<8x1xf32>
    %131 = vector.broadcast %130 : vector<8x1xf32> to vector<8x256xf32>
    %132 = arith.mulf %131, %128 : vector<8x256xf32>
    %133 = arith.subf %125, %132 : vector<8x256xf32>
    %134 = vector.extract_strided_slice %93 {offsets = [4, 0], sizes = [1, 256], strides = [1, 1]} : vector<8x256xf32> to vector<1x256xf32>
    %135 = vector.shape_cast %134 : vector<1x256xf32> to vector<1x256xf32>
    %136 = vector.broadcast %135 : vector<1x256xf32> to vector<8x256xf32>
    %cst_43 = arith.constant 0.0712685436 : f32
    %137 = vector.broadcast %cst_43 : f32 to vector<8x1xf32>
    %138 = arith.mulf %137, %10 : vector<8x1xf32>
    %139 = vector.broadcast %138 : vector<8x1xf32> to vector<8x256xf32>
    %140 = arith.mulf %139, %136 : vector<8x256xf32>
    %141 = arith.subf %133, %140 : vector<8x256xf32>
    %142 = vector.extract_strided_slice %93 {offsets = [5, 0], sizes = [1, 256], strides = [1, 1]} : vector<8x256xf32> to vector<1x256xf32>
    %143 = vector.shape_cast %142 : vector<1x256xf32> to vector<1x256xf32>
    %144 = vector.broadcast %143 : vector<1x256xf32> to vector<8x256xf32>
    %cst_44 = arith.constant 0.0712685436 : f32
    %145 = vector.broadcast %cst_44 : f32 to vector<8x1xf32>
    %146 = arith.mulf %145, %12 : vector<8x1xf32>
    %147 = vector.broadcast %146 : vector<8x1xf32> to vector<8x256xf32>
    %148 = arith.mulf %147, %144 : vector<8x256xf32>
    %149 = arith.subf %141, %148 : vector<8x256xf32>
    %150 = vector.extract_strided_slice %93 {offsets = [6, 0], sizes = [1, 256], strides = [1, 1]} : vector<8x256xf32> to vector<1x256xf32>
    %151 = vector.shape_cast %150 : vector<1x256xf32> to vector<1x256xf32>
    %152 = vector.broadcast %151 : vector<1x256xf32> to vector<8x256xf32>
    %cst_45 = arith.constant 0.0712685436 : f32
    %153 = vector.broadcast %cst_45 : f32 to vector<8x1xf32>
    %154 = arith.mulf %153, %14 : vector<8x1xf32>
    %155 = vector.broadcast %154 : vector<8x1xf32> to vector<8x256xf32>
    %156 = arith.mulf %155, %152 : vector<8x256xf32>
    %157 = arith.subf %149, %156 : vector<8x256xf32>
    %158 = vector.extract_strided_slice %93 {offsets = [7, 0], sizes = [1, 256], strides = [1, 1]} : vector<8x256xf32> to vector<1x256xf32>
    %159 = vector.shape_cast %158 : vector<1x256xf32> to vector<1x256xf32>
    %160 = vector.broadcast %159 : vector<1x256xf32> to vector<8x256xf32>
    %cst_46 = arith.constant 0.0712685436 : f32
    %161 = vector.broadcast %cst_46 : f32 to vector<8x1xf32>
    %162 = arith.mulf %161, %16 : vector<8x1xf32>
    %163 = vector.broadcast %162 : vector<8x1xf32> to vector<8x256xf32>
    %164 = arith.mulf %163, %160 : vector<8x256xf32>
    %165 = arith.subf %157, %164 : vector<8x256xf32>
    %c1_47 = arith.constant 1 : index
    %c0_48 = arith.constant 0 : index
    %c0_49 = arith.constant 0 : index
    %166 = vector.load %arg3[%c1_47, %c0_48, %c0_49] : memref<7x8x256xf32, #tpu.memory_space<vmem>>, vector<1x8x256xf32>
    %167 = vector.shape_cast %166 : vector<1x8x256xf32> to vector<8x256xf32>
    %cst_50 = arith.constant 0.130985275 : f32
    %168 = vector.broadcast %cst_50 : f32 to vector<8x256xf32>
    %169 = arith.mulf %168, %167 : vector<8x256xf32>
    %170 = arith.addf %165, %169 : vector<8x256xf32>
    %cst_51 = arith.constant 1.00723493 : f32
    %171 = vector.broadcast %cst_51 : f32 to vector<8x256xf32>
    %172 = arith.mulf %171, %170 : vector<8x256xf32>
    %c2_52 = arith.constant 2 : index
    %c0_53 = arith.constant 0 : index
    %c0_54 = arith.constant 0 : index
    %173 = vector.load %arg2[%c2_52, %c0_53, %c0_54] : memref<8x8x1xf32, #tpu.memory_space<vmem>>, vector<1x8x1xf32>
    %174 = vector.shape_cast %173 : vector<1x8x1xf32> to vector<8x1xf32>
    %cst_55 = arith.constant 0.0699040666 : f32
    %175 = vector.broadcast %cst_55 : f32 to vector<8x1xf32>
    %176 = arith.mulf %175, %174 : vector<8x1xf32>
    %177 = vector.broadcast %176 : vector<8x1xf32> to vector<8x256xf32>
    %178 = arith.subf %172, %177 : vector<8x256xf32>
    %179 = vector.extract_strided_slice %170 {offsets = [0, 0], sizes = [1, 256], strides = [1, 1]} : vector<8x256xf32> to vector<1x256xf32>
    %180 = vector.shape_cast %179 : vector<1x256xf32> to vector<1x256xf32>
    %181 = vector.broadcast %180 : vector<1x256xf32> to vector<8x256xf32>
    %cst_56 = arith.constant 0.0699040666 : f32
    %182 = vector.broadcast %cst_56 : f32 to vector<8x1xf32>
    %183 = arith.mulf %182, %2 : vector<8x1xf32>
    %184 = vector.broadcast %183 : vector<8x1xf32> to vector<8x256xf32>
    %185 = arith.mulf %184, %181 : vector<8x256xf32>
    %186 = arith.subf %178, %185 : vector<8x256xf32>
    %187 = vector.extract_strided_slice %170 {offsets = [1, 0], sizes = [1, 256], strides = [1, 1]} : vector<8x256xf32> to vector<1x256xf32>
    %188 = vector.shape_cast %187 : vector<1x256xf32> to vector<1x256xf32>
    %189 = vector.broadcast %188 : vector<1x256xf32> to vector<8x256xf32>
    %cst_57 = arith.constant 0.0699040666 : f32
    %190 = vector.broadcast %cst_57 : f32 to vector<8x1xf32>
    %191 = arith.mulf %190, %4 : vector<8x1xf32>
    %192 = vector.broadcast %191 : vector<8x1xf32> to vector<8x256xf32>
    %193 = arith.mulf %192, %189 : vector<8x256xf32>
    %194 = arith.subf %186, %193 : vector<8x256xf32>
    %195 = vector.extract_strided_slice %170 {offsets = [2, 0], sizes = [1, 256], strides = [1, 1]} : vector<8x256xf32> to vector<1x256xf32>
    %196 = vector.shape_cast %195 : vector<1x256xf32> to vector<1x256xf32>
    %197 = vector.broadcast %196 : vector<1x256xf32> to vector<8x256xf32>
    %cst_58 = arith.constant 0.0699040666 : f32
    %198 = vector.broadcast %cst_58 : f32 to vector<8x1xf32>
    %199 = arith.mulf %198, %6 : vector<8x1xf32>
    %200 = vector.broadcast %199 : vector<8x1xf32> to vector<8x256xf32>
    %201 = arith.mulf %200, %197 : vector<8x256xf32>
    %202 = arith.subf %194, %201 : vector<8x256xf32>
    %203 = vector.extract_strided_slice %170 {offsets = [3, 0], sizes = [1, 256], strides = [1, 1]} : vector<8x256xf32> to vector<1x256xf32>
    %204 = vector.shape_cast %203 : vector<1x256xf32> to vector<1x256xf32>
    %205 = vector.broadcast %204 : vector<1x256xf32> to vector<8x256xf32>
    %cst_59 = arith.constant 0.0699040666 : f32
    %206 = vector.broadcast %cst_59 : f32 to vector<8x1xf32>
    %207 = arith.mulf %206, %8 : vector<8x1xf32>
    %208 = vector.broadcast %207 : vector<8x1xf32> to vector<8x256xf32>
    %209 = arith.mulf %208, %205 : vector<8x256xf32>
    %210 = arith.subf %202, %209 : vector<8x256xf32>
    %211 = vector.extract_strided_slice %170 {offsets = [4, 0], sizes = [1, 256], strides = [1, 1]} : vector<8x256xf32> to vector<1x256xf32>
    %212 = vector.shape_cast %211 : vector<1x256xf32> to vector<1x256xf32>
    %213 = vector.broadcast %212 : vector<1x256xf32> to vector<8x256xf32>
    %cst_60 = arith.constant 0.0699040666 : f32
    %214 = vector.broadcast %cst_60 : f32 to vector<8x1xf32>
    %215 = arith.mulf %214, %10 : vector<8x1xf32>
    %216 = vector.broadcast %215 : vector<8x1xf32> to vector<8x256xf32>
    %217 = arith.mulf %216, %213 : vector<8x256xf32>
    %218 = arith.subf %210, %217 : vector<8x256xf32>
    %219 = vector.extract_strided_slice %170 {offsets = [5, 0], sizes = [1, 256], strides = [1, 1]} : vector<8x256xf32> to vector<1x256xf32>
    %220 = vector.shape_cast %219 : vector<1x256xf32> to vector<1x256xf32>
    %221 = vector.broadcast %220 : vector<1x256xf32> to vector<8x256xf32>
    %cst_61 = arith.constant 0.0699040666 : f32
    %222 = vector.broadcast %cst_61 : f32 to vector<8x1xf32>
    %223 = arith.mulf %222, %12 : vector<8x1xf32>
    %224 = vector.broadcast %223 : vector<8x1xf32> to vector<8x256xf32>
    %225 = arith.mulf %224, %221 : vector<8x256xf32>
    %226 = arith.subf %218, %225 : vector<8x256xf32>
    %227 = vector.extract_strided_slice %170 {offsets = [6, 0], sizes = [1, 256], strides = [1, 1]} : vector<8x256xf32> to vector<1x256xf32>
    %228 = vector.shape_cast %227 : vector<1x256xf32> to vector<1x256xf32>
    %229 = vector.broadcast %228 : vector<1x256xf32> to vector<8x256xf32>
    %cst_62 = arith.constant 0.0699040666 : f32
    %230 = vector.broadcast %cst_62 : f32 to vector<8x1xf32>
    %231 = arith.mulf %230, %14 : vector<8x1xf32>
    %232 = vector.broadcast %231 : vector<8x1xf32> to vector<8x256xf32>
    %233 = arith.mulf %232, %229 : vector<8x256xf32>
    %234 = arith.subf %226, %233 : vector<8x256xf32>
    %235 = vector.extract_strided_slice %170 {offsets = [7, 0], sizes = [1, 256], strides = [1, 1]} : vector<8x256xf32> to vector<1x256xf32>
    %236 = vector.shape_cast %235 : vector<1x256xf32> to vector<1x256xf32>
    %237 = vector.broadcast %236 : vector<1x256xf32> to vector<8x256xf32>
    %cst_63 = arith.constant 0.0699040666 : f32
    %238 = vector.broadcast %cst_63 : f32 to vector<8x1xf32>
    %239 = arith.mulf %238, %16 : vector<8x1xf32>
    %240 = vector.broadcast %239 : vector<8x1xf32> to vector<8x256xf32>
    %241 = arith.mulf %240, %237 : vector<8x256xf32>
    %242 = arith.subf %234, %241 : vector<8x256xf32>
    %c2_64 = arith.constant 2 : index
    %c0_65 = arith.constant 0 : index
    %c0_66 = arith.constant 0 : index
    %243 = vector.load %arg3[%c2_64, %c0_65, %c0_66] : memref<7x8x256xf32, #tpu.memory_space<vmem>>, vector<1x8x256xf32>
    %244 = vector.shape_cast %243 : vector<1x8x256xf32> to vector<8x256xf32>
    %cst_67 = arith.constant 0.119642325 : f32
    %245 = vector.broadcast %cst_67 : f32 to vector<8x256xf32>
    %246 = arith.mulf %245, %244 : vector<8x256xf32>
    %247 = arith.addf %242, %246 : vector<8x256xf32>
    %cst_68 = arith.constant 1.00578558 : f32
    %248 = vector.broadcast %cst_68 : f32 to vector<8x256xf32>
    %249 = arith.mulf %248, %247 : vector<8x256xf32>
    %c3_69 = arith.constant 3 : index
    %c0_70 = arith.constant 0 : index
    %c0_71 = arith.constant 0 : index
    %250 = vector.load %arg2[%c3_69, %c0_70, %c0_71] : memref<8x8x1xf32, #tpu.memory_space<vmem>>, vector<1x8x1xf32>
    %251 = vector.shape_cast %250 : vector<1x8x1xf32> to vector<8x1xf32>
    %cst_72 = arith.constant 0.0681821555 : f32
    %252 = vector.broadcast %cst_72 : f32 to vector<8x1xf32>
    %253 = arith.mulf %252, %251 : vector<8x1xf32>
    %254 = vector.broadcast %253 : vector<8x1xf32> to vector<8x256xf32>
    %255 = arith.subf %249, %254 : vector<8x256xf32>
    %256 = vector.extract_strided_slice %247 {offsets = [0, 0], sizes = [1, 256], strides = [1, 1]} : vector<8x256xf32> to vector<1x256xf32>
    %257 = vector.shape_cast %256 : vector<1x256xf32> to vector<1x256xf32>
    %258 = vector.broadcast %257 : vector<1x256xf32> to vector<8x256xf32>
    %cst_73 = arith.constant 0.0681821555 : f32
    %259 = vector.broadcast %cst_73 : f32 to vector<8x1xf32>
    %260 = arith.mulf %259, %2 : vector<8x1xf32>
    %261 = vector.broadcast %260 : vector<8x1xf32> to vector<8x256xf32>
    %262 = arith.mulf %261, %258 : vector<8x256xf32>
    %263 = arith.subf %255, %262 : vector<8x256xf32>
    %264 = vector.extract_strided_slice %247 {offsets = [1, 0], sizes = [1, 256], strides = [1, 1]} : vector<8x256xf32> to vector<1x256xf32>
    %265 = vector.shape_cast %264 : vector<1x256xf32> to vector<1x256xf32>
    %266 = vector.broadcast %265 : vector<1x256xf32> to vector<8x256xf32>
    %cst_74 = arith.constant 0.0681821555 : f32
    %267 = vector.broadcast %cst_74 : f32 to vector<8x1xf32>
    %268 = arith.mulf %267, %4 : vector<8x1xf32>
    %269 = vector.broadcast %268 : vector<8x1xf32> to vector<8x256xf32>
    %270 = arith.mulf %269, %266 : vector<8x256xf32>
    %271 = arith.subf %263, %270 : vector<8x256xf32>
    %272 = vector.extract_strided_slice %247 {offsets = [2, 0], sizes = [1, 256], strides = [1, 1]} : vector<8x256xf32> to vector<1x256xf32>
    %273 = vector.shape_cast %272 : vector<1x256xf32> to vector<1x256xf32>
    %274 = vector.broadcast %273 : vector<1x256xf32> to vector<8x256xf32>
    %cst_75 = arith.constant 0.0681821555 : f32
    %275 = vector.broadcast %cst_75 : f32 to vector<8x1xf32>
    %276 = arith.mulf %275, %6 : vector<8x1xf32>
    %277 = vector.broadcast %276 : vector<8x1xf32> to vector<8x256xf32>
    %278 = arith.mulf %277, %274 : vector<8x256xf32>
    %279 = arith.subf %271, %278 : vector<8x256xf32>
    %280 = vector.extract_strided_slice %247 {offsets = [3, 0], sizes = [1, 256], strides = [1, 1]} : vector<8x256xf32> to vector<1x256xf32>
    %281 = vector.shape_cast %280 : vector<1x256xf32> to vector<1x256xf32>
    %282 = vector.broadcast %281 : vector<1x256xf32> to vector<8x256xf32>
    %cst_76 = arith.constant 0.0681821555 : f32
    %283 = vector.broadcast %cst_76 : f32 to vector<8x1xf32>
    %284 = arith.mulf %283, %8 : vector<8x1xf32>
    %285 = vector.broadcast %284 : vector<8x1xf32> to vector<8x256xf32>
    %286 = arith.mulf %285, %282 : vector<8x256xf32>
    %287 = arith.subf %279, %286 : vector<8x256xf32>
    %288 = vector.extract_strided_slice %247 {offsets = [4, 0], sizes = [1, 256], strides = [1, 1]} : vector<8x256xf32> to vector<1x256xf32>
    %289 = vector.shape_cast %288 : vector<1x256xf32> to vector<1x256xf32>
    %290 = vector.broadcast %289 : vector<1x256xf32> to vector<8x256xf32>
    %cst_77 = arith.constant 0.0681821555 : f32
    %291 = vector.broadcast %cst_77 : f32 to vector<8x1xf32>
    %292 = arith.mulf %291, %10 : vector<8x1xf32>
    %293 = vector.broadcast %292 : vector<8x1xf32> to vector<8x256xf32>
    %294 = arith.mulf %293, %290 : vector<8x256xf32>
    %295 = arith.subf %287, %294 : vector<8x256xf32>
    %296 = vector.extract_strided_slice %247 {offsets = [5, 0], sizes = [1, 256], strides = [1, 1]} : vector<8x256xf32> to vector<1x256xf32>
    %297 = vector.shape_cast %296 : vector<1x256xf32> to vector<1x256xf32>
    %298 = vector.broadcast %297 : vector<1x256xf32> to vector<8x256xf32>
    %cst_78 = arith.constant 0.0681821555 : f32
    %299 = vector.broadcast %cst_78 : f32 to vector<8x1xf32>
    %300 = arith.mulf %299, %12 : vector<8x1xf32>
    %301 = vector.broadcast %300 : vector<8x1xf32> to vector<8x256xf32>
    %302 = arith.mulf %301, %298 : vector<8x256xf32>
    %303 = arith.subf %295, %302 : vector<8x256xf32>
    %304 = vector.extract_strided_slice %247 {offsets = [6, 0], sizes = [1, 256], strides = [1, 1]} : vector<8x256xf32> to vector<1x256xf32>
    %305 = vector.shape_cast %304 : vector<1x256xf32> to vector<1x256xf32>
    %306 = vector.broadcast %305 : vector<1x256xf32> to vector<8x256xf32>
    %cst_79 = arith.constant 0.0681821555 : f32
    %307 = vector.broadcast %cst_79 : f32 to vector<8x1xf32>
    %308 = arith.mulf %307, %14 : vector<8x1xf32>
    %309 = vector.broadcast %308 : vector<8x1xf32> to vector<8x256xf32>
    %310 = arith.mulf %309, %306 : vector<8x256xf32>
    %311 = arith.subf %303, %310 : vector<8x256xf32>
    %312 = vector.extract_strided_slice %247 {offsets = [7, 0], sizes = [1, 256], strides = [1, 1]} : vector<8x256xf32> to vector<1x256xf32>
    %313 = vector.shape_cast %312 : vector<1x256xf32> to vector<1x256xf32>
    %314 = vector.broadcast %313 : vector<1x256xf32> to vector<8x256xf32>
    %cst_80 = arith.constant 0.0681821555 : f32
    %315 = vector.broadcast %cst_80 : f32 to vector<8x1xf32>
    %316 = arith.mulf %315, %16 : vector<8x1xf32>
    %317 = vector.broadcast %316 : vector<8x1xf32> to vector<8x256xf32>
    %318 = arith.mulf %317, %314 : vector<8x256xf32>
    %319 = arith.subf %311, %318 : vector<8x256xf32>
    %c3_81 = arith.constant 3 : index
    %c0_82 = arith.constant 0 : index
    %c0_83 = arith.constant 0 : index
    %320 = vector.load %arg3[%c3_81, %c0_82, %c0_83] : memref<7x8x256xf32, #tpu.memory_space<vmem>>, vector<1x8x256xf32>
    %321 = vector.shape_cast %320 : vector<1x8x256xf32> to vector<8x256xf32>
    %cst_84 = arith.constant 0.107104756 : f32
    %322 = vector.broadcast %cst_84 : f32 to vector<8x256xf32>
    %323 = arith.mulf %322, %321 : vector<8x256xf32>
    %324 = arith.addf %319, %323 : vector<8x256xf32>
    %cst_85 = arith.constant 1.00434244 : f32
    %325 = vector.broadcast %cst_85 : f32 to vector<8x256xf32>
    %326 = arith.mulf %325, %324 : vector<8x256xf32>
    %c4_86 = arith.constant 4 : index
    %c0_87 = arith.constant 0 : index
    %c0_88 = arith.constant 0 : index
    %327 = vector.load %arg2[%c4_86, %c0_87, %c0_88] : memref<8x8x1xf32, #tpu.memory_space<vmem>>, vector<1x8x1xf32>
    %328 = vector.shape_cast %327 : vector<1x8x1xf32> to vector<8x1xf32>
    %cst_89 = arith.constant 0.0657666251 : f32
    %329 = vector.broadcast %cst_89 : f32 to vector<8x1xf32>
    %330 = arith.mulf %329, %328 : vector<8x1xf32>
    %331 = vector.broadcast %330 : vector<8x1xf32> to vector<8x256xf32>
    %332 = arith.subf %326, %331 : vector<8x256xf32>
    %333 = vector.extract_strided_slice %324 {offsets = [0, 0], sizes = [1, 256], strides = [1, 1]} : vector<8x256xf32> to vector<1x256xf32>
    %334 = vector.shape_cast %333 : vector<1x256xf32> to vector<1x256xf32>
    %335 = vector.broadcast %334 : vector<1x256xf32> to vector<8x256xf32>
    %cst_90 = arith.constant 0.0657666251 : f32
    %336 = vector.broadcast %cst_90 : f32 to vector<8x1xf32>
    %337 = arith.mulf %336, %2 : vector<8x1xf32>
    %338 = vector.broadcast %337 : vector<8x1xf32> to vector<8x256xf32>
    %339 = arith.mulf %338, %335 : vector<8x256xf32>
    %340 = arith.subf %332, %339 : vector<8x256xf32>
    %341 = vector.extract_strided_slice %324 {offsets = [1, 0], sizes = [1, 256], strides = [1, 1]} : vector<8x256xf32> to vector<1x256xf32>
    %342 = vector.shape_cast %341 : vector<1x256xf32> to vector<1x256xf32>
    %343 = vector.broadcast %342 : vector<1x256xf32> to vector<8x256xf32>
    %cst_91 = arith.constant 0.0657666251 : f32
    %344 = vector.broadcast %cst_91 : f32 to vector<8x1xf32>
    %345 = arith.mulf %344, %4 : vector<8x1xf32>
    %346 = vector.broadcast %345 : vector<8x1xf32> to vector<8x256xf32>
    %347 = arith.mulf %346, %343 : vector<8x256xf32>
    %348 = arith.subf %340, %347 : vector<8x256xf32>
    %349 = vector.extract_strided_slice %324 {offsets = [2, 0], sizes = [1, 256], strides = [1, 1]} : vector<8x256xf32> to vector<1x256xf32>
    %350 = vector.shape_cast %349 : vector<1x256xf32> to vector<1x256xf32>
    %351 = vector.broadcast %350 : vector<1x256xf32> to vector<8x256xf32>
    %cst_92 = arith.constant 0.0657666251 : f32
    %352 = vector.broadcast %cst_92 : f32 to vector<8x1xf32>
    %353 = arith.mulf %352, %6 : vector<8x1xf32>
    %354 = vector.broadcast %353 : vector<8x1xf32> to vector<8x256xf32>
    %355 = arith.mulf %354, %351 : vector<8x256xf32>
    %356 = arith.subf %348, %355 : vector<8x256xf32>
    %357 = vector.extract_strided_slice %324 {offsets = [3, 0], sizes = [1, 256], strides = [1, 1]} : vector<8x256xf32> to vector<1x256xf32>
    %358 = vector.shape_cast %357 : vector<1x256xf32> to vector<1x256xf32>
    %359 = vector.broadcast %358 : vector<1x256xf32> to vector<8x256xf32>
    %cst_93 = arith.constant 0.0657666251 : f32
    %360 = vector.broadcast %cst_93 : f32 to vector<8x1xf32>
    %361 = arith.mulf %360, %8 : vector<8x1xf32>
    %362 = vector.broadcast %361 : vector<8x1xf32> to vector<8x256xf32>
    %363 = arith.mulf %362, %359 : vector<8x256xf32>
    %364 = arith.subf %356, %363 : vector<8x256xf32>
    %365 = vector.extract_strided_slice %324 {offsets = [4, 0], sizes = [1, 256], strides = [1, 1]} : vector<8x256xf32> to vector<1x256xf32>
    %366 = vector.shape_cast %365 : vector<1x256xf32> to vector<1x256xf32>
    %367 = vector.broadcast %366 : vector<1x256xf32> to vector<8x256xf32>
    %cst_94 = arith.constant 0.0657666251 : f32
    %368 = vector.broadcast %cst_94 : f32 to vector<8x1xf32>
    %369 = arith.mulf %368, %10 : vector<8x1xf32>
    %370 = vector.broadcast %369 : vector<8x1xf32> to vector<8x256xf32>
    %371 = arith.mulf %370, %367 : vector<8x256xf32>
    %372 = arith.subf %364, %371 : vector<8x256xf32>
    %373 = vector.extract_strided_slice %324 {offsets = [5, 0], sizes = [1, 256], strides = [1, 1]} : vector<8x256xf32> to vector<1x256xf32>
    %374 = vector.shape_cast %373 : vector<1x256xf32> to vector<1x256xf32>
    %375 = vector.broadcast %374 : vector<1x256xf32> to vector<8x256xf32>
    %cst_95 = arith.constant 0.0657666251 : f32
    %376 = vector.broadcast %cst_95 : f32 to vector<8x1xf32>
    %377 = arith.mulf %376, %12 : vector<8x1xf32>
    %378 = vector.broadcast %377 : vector<8x1xf32> to vector<8x256xf32>
    %379 = arith.mulf %378, %375 : vector<8x256xf32>
    %380 = arith.subf %372, %379 : vector<8x256xf32>
    %381 = vector.extract_strided_slice %324 {offsets = [6, 0], sizes = [1, 256], strides = [1, 1]} : vector<8x256xf32> to vector<1x256xf32>
    %382 = vector.shape_cast %381 : vector<1x256xf32> to vector<1x256xf32>
    %383 = vector.broadcast %382 : vector<1x256xf32> to vector<8x256xf32>
    %cst_96 = arith.constant 0.0657666251 : f32
    %384 = vector.broadcast %cst_96 : f32 to vector<8x1xf32>
    %385 = arith.mulf %384, %14 : vector<8x1xf32>
    %386 = vector.broadcast %385 : vector<8x1xf32> to vector<8x256xf32>
    %387 = arith.mulf %386, %383 : vector<8x256xf32>
    %388 = arith.subf %380, %387 : vector<8x256xf32>
    %389 = vector.extract_strided_slice %324 {offsets = [7, 0], sizes = [1, 256], strides = [1, 1]} : vector<8x256xf32> to vector<1x256xf32>
    %390 = vector.shape_cast %389 : vector<1x256xf32> to vector<1x256xf32>
    %391 = vector.broadcast %390 : vector<1x256xf32> to vector<8x256xf32>
    %cst_97 = arith.constant 0.0657666251 : f32
    %392 = vector.broadcast %cst_97 : f32 to vector<8x1xf32>
    %393 = arith.mulf %392, %16 : vector<8x1xf32>
    %394 = vector.broadcast %393 : vector<8x1xf32> to vector<8x256xf32>
    %395 = arith.mulf %394, %391 : vector<8x256xf32>
    %396 = arith.subf %388, %395 : vector<8x256xf32>
    %c4_98 = arith.constant 4 : index
    %c0_99 = arith.constant 0 : index
    %c0_100 = arith.constant 0 : index
    %397 = vector.load %arg3[%c4_98, %c0_99, %c0_100] : memref<7x8x256xf32, #tpu.memory_space<vmem>>, vector<1x8x256xf32>
    %398 = vector.shape_cast %397 : vector<1x8x256xf32> to vector<8x256xf32>
    %cst_101 = arith.constant 0.0928901061 : f32
    %399 = vector.broadcast %cst_101 : f32 to vector<8x256xf32>
    %400 = arith.mulf %399, %398 : vector<8x256xf32>
    %401 = arith.addf %396, %400 : vector<8x256xf32>
    %cst_102 = arith.constant 1.00290549 : f32
    %402 = vector.broadcast %cst_102 : f32 to vector<8x256xf32>
    %403 = arith.mulf %402, %401 : vector<8x256xf32>
    %c5_103 = arith.constant 5 : index
    %c0_104 = arith.constant 0 : index
    %c0_105 = arith.constant 0 : index
    %404 = vector.load %arg2[%c5_103, %c0_104, %c0_105] : memref<8x8x1xf32, #tpu.memory_space<vmem>>, vector<1x8x1xf32>
    %405 = vector.shape_cast %404 : vector<1x8x1xf32> to vector<8x1xf32>
    %cst_106 = arith.constant 0.0618176386 : f32
    %406 = vector.broadcast %cst_106 : f32 to vector<8x1xf32>
    %407 = arith.mulf %406, %405 : vector<8x1xf32>
    %408 = vector.broadcast %407 : vector<8x1xf32> to vector<8x256xf32>
    %409 = arith.subf %403, %408 : vector<8x256xf32>
    %410 = vector.extract_strided_slice %401 {offsets = [0, 0], sizes = [1, 256], strides = [1, 1]} : vector<8x256xf32> to vector<1x256xf32>
    %411 = vector.shape_cast %410 : vector<1x256xf32> to vector<1x256xf32>
    %412 = vector.broadcast %411 : vector<1x256xf32> to vector<8x256xf32>
    %cst_107 = arith.constant 0.0618176386 : f32
    %413 = vector.broadcast %cst_107 : f32 to vector<8x1xf32>
    %414 = arith.mulf %413, %2 : vector<8x1xf32>
    %415 = vector.broadcast %414 : vector<8x1xf32> to vector<8x256xf32>
    %416 = arith.mulf %415, %412 : vector<8x256xf32>
    %417 = arith.subf %409, %416 : vector<8x256xf32>
    %418 = vector.extract_strided_slice %401 {offsets = [1, 0], sizes = [1, 256], strides = [1, 1]} : vector<8x256xf32> to vector<1x256xf32>
    %419 = vector.shape_cast %418 : vector<1x256xf32> to vector<1x256xf32>
    %420 = vector.broadcast %419 : vector<1x256xf32> to vector<8x256xf32>
    %cst_108 = arith.constant 0.0618176386 : f32
    %421 = vector.broadcast %cst_108 : f32 to vector<8x1xf32>
    %422 = arith.mulf %421, %4 : vector<8x1xf32>
    %423 = vector.broadcast %422 : vector<8x1xf32> to vector<8x256xf32>
    %424 = arith.mulf %423, %420 : vector<8x256xf32>
    %425 = arith.subf %417, %424 : vector<8x256xf32>
    %426 = vector.extract_strided_slice %401 {offsets = [2, 0], sizes = [1, 256], strides = [1, 1]} : vector<8x256xf32> to vector<1x256xf32>
    %427 = vector.shape_cast %426 : vector<1x256xf32> to vector<1x256xf32>
    %428 = vector.broadcast %427 : vector<1x256xf32> to vector<8x256xf32>
    %cst_109 = arith.constant 0.0618176386 : f32
    %429 = vector.broadcast %cst_109 : f32 to vector<8x1xf32>
    %430 = arith.mulf %429, %6 : vector<8x1xf32>
    %431 = vector.broadcast %430 : vector<8x1xf32> to vector<8x256xf32>
    %432 = arith.mulf %431, %428 : vector<8x256xf32>
    %433 = arith.subf %425, %432 : vector<8x256xf32>
    %434 = vector.extract_strided_slice %401 {offsets = [3, 0], sizes = [1, 256], strides = [1, 1]} : vector<8x256xf32> to vector<1x256xf32>
    %435 = vector.shape_cast %434 : vector<1x256xf32> to vector<1x256xf32>
    %436 = vector.broadcast %435 : vector<1x256xf32> to vector<8x256xf32>
    %cst_110 = arith.constant 0.0618176386 : f32
    %437 = vector.broadcast %cst_110 : f32 to vector<8x1xf32>
    %438 = arith.mulf %437, %8 : vector<8x1xf32>
    %439 = vector.broadcast %438 : vector<8x1xf32> to vector<8x256xf32>
    %440 = arith.mulf %439, %436 : vector<8x256xf32>
    %441 = arith.subf %433, %440 : vector<8x256xf32>
    %442 = vector.extract_strided_slice %401 {offsets = [4, 0], sizes = [1, 256], strides = [1, 1]} : vector<8x256xf32> to vector<1x256xf32>
    %443 = vector.shape_cast %442 : vector<1x256xf32> to vector<1x256xf32>
    %444 = vector.broadcast %443 : vector<1x256xf32> to vector<8x256xf32>
    %cst_111 = arith.constant 0.0618176386 : f32
    %445 = vector.broadcast %cst_111 : f32 to vector<8x1xf32>
    %446 = arith.mulf %445, %10 : vector<8x1xf32>
    %447 = vector.broadcast %446 : vector<8x1xf32> to vector<8x256xf32>
    %448 = arith.mulf %447, %444 : vector<8x256xf32>
    %449 = arith.subf %441, %448 : vector<8x256xf32>
    %450 = vector.extract_strided_slice %401 {offsets = [5, 0], sizes = [1, 256], strides = [1, 1]} : vector<8x256xf32> to vector<1x256xf32>
    %451 = vector.shape_cast %450 : vector<1x256xf32> to vector<1x256xf32>
    %452 = vector.broadcast %451 : vector<1x256xf32> to vector<8x256xf32>
    %cst_112 = arith.constant 0.0618176386 : f32
    %453 = vector.broadcast %cst_112 : f32 to vector<8x1xf32>
    %454 = arith.mulf %453, %12 : vector<8x1xf32>
    %455 = vector.broadcast %454 : vector<8x1xf32> to vector<8x256xf32>
    %456 = arith.mulf %455, %452 : vector<8x256xf32>
    %457 = arith.subf %449, %456 : vector<8x256xf32>
    %458 = vector.extract_strided_slice %401 {offsets = [6, 0], sizes = [1, 256], strides = [1, 1]} : vector<8x256xf32> to vector<1x256xf32>
    %459 = vector.shape_cast %458 : vector<1x256xf32> to vector<1x256xf32>
    %460 = vector.broadcast %459 : vector<1x256xf32> to vector<8x256xf32>
    %cst_113 = arith.constant 0.0618176386 : f32
    %461 = vector.broadcast %cst_113 : f32 to vector<8x1xf32>
    %462 = arith.mulf %461, %14 : vector<8x1xf32>
    %463 = vector.broadcast %462 : vector<8x1xf32> to vector<8x256xf32>
    %464 = arith.mulf %463, %460 : vector<8x256xf32>
    %465 = arith.subf %457, %464 : vector<8x256xf32>
    %466 = vector.extract_strided_slice %401 {offsets = [7, 0], sizes = [1, 256], strides = [1, 1]} : vector<8x256xf32> to vector<1x256xf32>
    %467 = vector.shape_cast %466 : vector<1x256xf32> to vector<1x256xf32>
    %468 = vector.broadcast %467 : vector<1x256xf32> to vector<8x256xf32>
    %cst_114 = arith.constant 0.0618176386 : f32
    %469 = vector.broadcast %cst_114 : f32 to vector<8x1xf32>
    %470 = arith.mulf %469, %16 : vector<8x1xf32>
    %471 = vector.broadcast %470 : vector<8x1xf32> to vector<8x256xf32>
    %472 = arith.mulf %471, %468 : vector<8x256xf32>
    %473 = arith.subf %465, %472 : vector<8x256xf32>
    %c5_115 = arith.constant 5 : index
    %c0_116 = arith.constant 0 : index
    %c0_117 = arith.constant 0 : index
    %474 = vector.load %arg3[%c5_115, %c0_116, %c0_117] : memref<7x8x256xf32, #tpu.memory_space<vmem>>, vector<1x8x256xf32>
    %475 = vector.shape_cast %474 : vector<1x8x256xf32> to vector<8x256xf32>
    %cst_118 = arith.constant 0.0760638863 : f32
    %476 = vector.broadcast %cst_118 : f32 to vector<8x256xf32>
    %477 = arith.mulf %476, %475 : vector<8x256xf32>
    %478 = arith.addf %473, %477 : vector<8x256xf32>
    %cst_119 = arith.constant 1.00147474 : f32
    %479 = vector.broadcast %cst_119 : f32 to vector<8x256xf32>
    %480 = arith.mulf %479, %478 : vector<8x256xf32>
    %c6_120 = arith.constant 6 : index
    %c0_121 = arith.constant 0 : index
    %c0_122 = arith.constant 0 : index
    %481 = vector.load %arg2[%c6_120, %c0_121, %c0_122] : memref<8x8x1xf32, #tpu.memory_space<vmem>>, vector<1x8x1xf32>
    %482 = vector.shape_cast %481 : vector<1x8x1xf32> to vector<8x1xf32>
    %cst_123 = arith.constant 0.0534305163 : f32
    %483 = vector.broadcast %cst_123 : f32 to vector<8x1xf32>
    %484 = arith.mulf %483, %482 : vector<8x1xf32>
    %485 = vector.broadcast %484 : vector<8x1xf32> to vector<8x256xf32>
    %486 = arith.subf %480, %485 : vector<8x256xf32>
    %487 = vector.extract_strided_slice %478 {offsets = [0, 0], sizes = [1, 256], strides = [1, 1]} : vector<8x256xf32> to vector<1x256xf32>
    %488 = vector.shape_cast %487 : vector<1x256xf32> to vector<1x256xf32>
    %489 = vector.broadcast %488 : vector<1x256xf32> to vector<8x256xf32>
    %cst_124 = arith.constant 0.0534305163 : f32
    %490 = vector.broadcast %cst_124 : f32 to vector<8x1xf32>
    %491 = arith.mulf %490, %2 : vector<8x1xf32>
    %492 = vector.broadcast %491 : vector<8x1xf32> to vector<8x256xf32>
    %493 = arith.mulf %492, %489 : vector<8x256xf32>
    %494 = arith.subf %486, %493 : vector<8x256xf32>
    %495 = vector.extract_strided_slice %478 {offsets = [1, 0], sizes = [1, 256], strides = [1, 1]} : vector<8x256xf32> to vector<1x256xf32>
    %496 = vector.shape_cast %495 : vector<1x256xf32> to vector<1x256xf32>
    %497 = vector.broadcast %496 : vector<1x256xf32> to vector<8x256xf32>
    %cst_125 = arith.constant 0.0534305163 : f32
    %498 = vector.broadcast %cst_125 : f32 to vector<8x1xf32>
    %499 = arith.mulf %498, %4 : vector<8x1xf32>
    %500 = vector.broadcast %499 : vector<8x1xf32> to vector<8x256xf32>
    %501 = arith.mulf %500, %497 : vector<8x256xf32>
    %502 = arith.subf %494, %501 : vector<8x256xf32>
    %503 = vector.extract_strided_slice %478 {offsets = [2, 0], sizes = [1, 256], strides = [1, 1]} : vector<8x256xf32> to vector<1x256xf32>
    %504 = vector.shape_cast %503 : vector<1x256xf32> to vector<1x256xf32>
    %505 = vector.broadcast %504 : vector<1x256xf32> to vector<8x256xf32>
    %cst_126 = arith.constant 0.0534305163 : f32
    %506 = vector.broadcast %cst_126 : f32 to vector<8x1xf32>
    %507 = arith.mulf %506, %6 : vector<8x1xf32>
    %508 = vector.broadcast %507 : vector<8x1xf32> to vector<8x256xf32>
    %509 = arith.mulf %508, %505 : vector<8x256xf32>
    %510 = arith.subf %502, %509 : vector<8x256xf32>
    %511 = vector.extract_strided_slice %478 {offsets = [3, 0], sizes = [1, 256], strides = [1, 1]} : vector<8x256xf32> to vector<1x256xf32>
    %512 = vector.shape_cast %511 : vector<1x256xf32> to vector<1x256xf32>
    %513 = vector.broadcast %512 : vector<1x256xf32> to vector<8x256xf32>
    %cst_127 = arith.constant 0.0534305163 : f32
    %514 = vector.broadcast %cst_127 : f32 to vector<8x1xf32>
    %515 = arith.mulf %514, %8 : vector<8x1xf32>
    %516 = vector.broadcast %515 : vector<8x1xf32> to vector<8x256xf32>
    %517 = arith.mulf %516, %513 : vector<8x256xf32>
    %518 = arith.subf %510, %517 : vector<8x256xf32>
    %519 = vector.extract_strided_slice %478 {offsets = [4, 0], sizes = [1, 256], strides = [1, 1]} : vector<8x256xf32> to vector<1x256xf32>
    %520 = vector.shape_cast %519 : vector<1x256xf32> to vector<1x256xf32>
    %521 = vector.broadcast %520 : vector<1x256xf32> to vector<8x256xf32>
    %cst_128 = arith.constant 0.0534305163 : f32
    %522 = vector.broadcast %cst_128 : f32 to vector<8x1xf32>
    %523 = arith.mulf %522, %10 : vector<8x1xf32>
    %524 = vector.broadcast %523 : vector<8x1xf32> to vector<8x256xf32>
    %525 = arith.mulf %524, %521 : vector<8x256xf32>
    %526 = arith.subf %518, %525 : vector<8x256xf32>
    %527 = vector.extract_strided_slice %478 {offsets = [5, 0], sizes = [1, 256], strides = [1, 1]} : vector<8x256xf32> to vector<1x256xf32>
    %528 = vector.shape_cast %527 : vector<1x256xf32> to vector<1x256xf32>
    %529 = vector.broadcast %528 : vector<1x256xf32> to vector<8x256xf32>
    %cst_129 = arith.constant 0.0534305163 : f32
    %530 = vector.broadcast %cst_129 : f32 to vector<8x1xf32>
    %531 = arith.mulf %530, %12 : vector<8x1xf32>
    %532 = vector.broadcast %531 : vector<8x1xf32> to vector<8x256xf32>
    %533 = arith.mulf %532, %529 : vector<8x256xf32>
    %534 = arith.subf %526, %533 : vector<8x256xf32>
    %535 = vector.extract_strided_slice %478 {offsets = [6, 0], sizes = [1, 256], strides = [1, 1]} : vector<8x256xf32> to vector<1x256xf32>
    %536 = vector.shape_cast %535 : vector<1x256xf32> to vector<1x256xf32>
    %537 = vector.broadcast %536 : vector<1x256xf32> to vector<8x256xf32>
    %cst_130 = arith.constant 0.0534305163 : f32
    %538 = vector.broadcast %cst_130 : f32 to vector<8x1xf32>
    %539 = arith.mulf %538, %14 : vector<8x1xf32>
    %540 = vector.broadcast %539 : vector<8x1xf32> to vector<8x256xf32>
    %541 = arith.mulf %540, %537 : vector<8x256xf32>
    %542 = arith.subf %534, %541 : vector<8x256xf32>
    %543 = vector.extract_strided_slice %478 {offsets = [7, 0], sizes = [1, 256], strides = [1, 1]} : vector<8x256xf32> to vector<1x256xf32>
    %544 = vector.shape_cast %543 : vector<1x256xf32> to vector<1x256xf32>
    %545 = vector.broadcast %544 : vector<1x256xf32> to vector<8x256xf32>
    %cst_131 = arith.constant 0.0534305163 : f32
    %546 = vector.broadcast %cst_131 : f32 to vector<8x1xf32>
    %547 = arith.mulf %546, %16 : vector<8x1xf32>
    %548 = vector.broadcast %547 : vector<8x1xf32> to vector<8x256xf32>
    %549 = arith.mulf %548, %545 : vector<8x256xf32>
    %550 = arith.subf %542, %549 : vector<8x256xf32>
    %c6_132 = arith.constant 6 : index
    %c0_133 = arith.constant 0 : index
    %c0_134 = arith.constant 0 : index
    %551 = vector.load %arg3[%c6_132, %c0_133, %c0_134] : memref<7x8x256xf32, #tpu.memory_space<vmem>>, vector<1x8x256xf32>
    %552 = vector.shape_cast %551 : vector<1x8x256xf32> to vector<8x256xf32>
    %cst_135 = arith.constant 0.0542481057 : f32
    %553 = vector.broadcast %cst_135 : f32 to vector<8x256xf32>
    %554 = arith.mulf %553, %552 : vector<8x256xf32>
    %555 = arith.addf %550, %554 : vector<8x256xf32>
    %cst_136 = arith.constant 1.000050e+00 : f32
    %556 = vector.broadcast %cst_136 : f32 to vector<8x256xf32>
    %557 = arith.mulf %556, %555 : vector<8x256xf32>
    %c7_137 = arith.constant 7 : index
    %c0_138 = arith.constant 0 : index
    %c0_139 = arith.constant 0 : index
    %558 = vector.load %arg2[%c7_137, %c0_138, %c0_139] : memref<8x8x1xf32, #tpu.memory_space<vmem>>, vector<1x8x1xf32>
    %559 = vector.shape_cast %558 : vector<1x8x1xf32> to vector<8x1xf32>
    %cst_140 = arith.constant 1.000050e-02 : f32
    %560 = vector.broadcast %cst_140 : f32 to vector<8x1xf32>
    %561 = arith.mulf %560, %559 : vector<8x1xf32>
    %562 = vector.broadcast %561 : vector<8x1xf32> to vector<8x256xf32>
    %563 = arith.subf %557, %562 : vector<8x256xf32>
    %564 = vector.extract_strided_slice %555 {offsets = [0, 0], sizes = [1, 256], strides = [1, 1]} : vector<8x256xf32> to vector<1x256xf32>
    %565 = vector.shape_cast %564 : vector<1x256xf32> to vector<1x256xf32>
    %566 = vector.broadcast %565 : vector<1x256xf32> to vector<8x256xf32>
    %cst_141 = arith.constant 1.000050e-02 : f32
    %567 = vector.broadcast %cst_141 : f32 to vector<8x1xf32>
    %568 = arith.mulf %567, %2 : vector<8x1xf32>
    %569 = vector.broadcast %568 : vector<8x1xf32> to vector<8x256xf32>
    %570 = arith.mulf %569, %566 : vector<8x256xf32>
    %571 = arith.subf %563, %570 : vector<8x256xf32>
    %572 = vector.extract_strided_slice %555 {offsets = [1, 0], sizes = [1, 256], strides = [1, 1]} : vector<8x256xf32> to vector<1x256xf32>
    %573 = vector.shape_cast %572 : vector<1x256xf32> to vector<1x256xf32>
    %574 = vector.broadcast %573 : vector<1x256xf32> to vector<8x256xf32>
    %cst_142 = arith.constant 1.000050e-02 : f32
    %575 = vector.broadcast %cst_142 : f32 to vector<8x1xf32>
    %576 = arith.mulf %575, %4 : vector<8x1xf32>
    %577 = vector.broadcast %576 : vector<8x1xf32> to vector<8x256xf32>
    %578 = arith.mulf %577, %574 : vector<8x256xf32>
    %579 = arith.subf %571, %578 : vector<8x256xf32>
    %580 = vector.extract_strided_slice %555 {offsets = [2, 0], sizes = [1, 256], strides = [1, 1]} : vector<8x256xf32> to vector<1x256xf32>
    %581 = vector.shape_cast %580 : vector<1x256xf32> to vector<1x256xf32>
    %582 = vector.broadcast %581 : vector<1x256xf32> to vector<8x256xf32>
    %cst_143 = arith.constant 1.000050e-02 : f32
    %583 = vector.broadcast %cst_143 : f32 to vector<8x1xf32>
    %584 = arith.mulf %583, %6 : vector<8x1xf32>
    %585 = vector.broadcast %584 : vector<8x1xf32> to vector<8x256xf32>
    %586 = arith.mulf %585, %582 : vector<8x256xf32>
    %587 = arith.subf %579, %586 : vector<8x256xf32>
    %588 = vector.extract_strided_slice %555 {offsets = [3, 0], sizes = [1, 256], strides = [1, 1]} : vector<8x256xf32> to vector<1x256xf32>
    %589 = vector.shape_cast %588 : vector<1x256xf32> to vector<1x256xf32>
    %590 = vector.broadcast %589 : vector<1x256xf32> to vector<8x256xf32>
    %cst_144 = arith.constant 1.000050e-02 : f32
    %591 = vector.broadcast %cst_144 : f32 to vector<8x1xf32>
    %592 = arith.mulf %591, %8 : vector<8x1xf32>
    %593 = vector.broadcast %592 : vector<8x1xf32> to vector<8x256xf32>
    %594 = arith.mulf %593, %590 : vector<8x256xf32>
    %595 = arith.subf %587, %594 : vector<8x256xf32>
    %596 = vector.extract_strided_slice %555 {offsets = [4, 0], sizes = [1, 256], strides = [1, 1]} : vector<8x256xf32> to vector<1x256xf32>
    %597 = vector.shape_cast %596 : vector<1x256xf32> to vector<1x256xf32>
    %598 = vector.broadcast %597 : vector<1x256xf32> to vector<8x256xf32>
    %cst_145 = arith.constant 1.000050e-02 : f32
    %599 = vector.broadcast %cst_145 : f32 to vector<8x1xf32>
    %600 = arith.mulf %599, %10 : vector<8x1xf32>
    %601 = vector.broadcast %600 : vector<8x1xf32> to vector<8x256xf32>
    %602 = arith.mulf %601, %598 : vector<8x256xf32>
    %603 = arith.subf %595, %602 : vector<8x256xf32>
    %604 = vector.extract_strided_slice %555 {offsets = [5, 0], sizes = [1, 256], strides = [1, 1]} : vector<8x256xf32> to vector<1x256xf32>
    %605 = vector.shape_cast %604 : vector<1x256xf32> to vector<1x256xf32>
    %606 = vector.broadcast %605 : vector<1x256xf32> to vector<8x256xf32>
    %cst_146 = arith.constant 1.000050e-02 : f32
    %607 = vector.broadcast %cst_146 : f32 to vector<8x1xf32>
    %608 = arith.mulf %607, %12 : vector<8x1xf32>
    %609 = vector.broadcast %608 : vector<8x1xf32> to vector<8x256xf32>
    %610 = arith.mulf %609, %606 : vector<8x256xf32>
    %611 = arith.subf %603, %610 : vector<8x256xf32>
    %612 = vector.extract_strided_slice %555 {offsets = [6, 0], sizes = [1, 256], strides = [1, 1]} : vector<8x256xf32> to vector<1x256xf32>
    %613 = vector.shape_cast %612 : vector<1x256xf32> to vector<1x256xf32>
    %614 = vector.broadcast %613 : vector<1x256xf32> to vector<8x256xf32>
    %cst_147 = arith.constant 1.000050e-02 : f32
    %615 = vector.broadcast %cst_147 : f32 to vector<8x1xf32>
    %616 = arith.mulf %615, %14 : vector<8x1xf32>
    %617 = vector.broadcast %616 : vector<8x1xf32> to vector<8x256xf32>
    %618 = arith.mulf %617, %614 : vector<8x256xf32>
    %619 = arith.subf %611, %618 : vector<8x256xf32>
    %620 = vector.extract_strided_slice %555 {offsets = [7, 0], sizes = [1, 256], strides = [1, 1]} : vector<8x256xf32> to vector<1x256xf32>
    %621 = vector.shape_cast %620 : vector<1x256xf32> to vector<1x256xf32>
    %622 = vector.broadcast %621 : vector<1x256xf32> to vector<8x256xf32>
    %cst_148 = arith.constant 1.000050e-02 : f32
    %623 = vector.broadcast %cst_148 : f32 to vector<8x1xf32>
    %624 = arith.mulf %623, %16 : vector<8x1xf32>
    %625 = vector.broadcast %624 : vector<8x1xf32> to vector<8x256xf32>
    %626 = arith.mulf %625, %622 : vector<8x256xf32>
    %627 = arith.subf %619, %626 : vector<8x256xf32>
    %cst_149 = arith.constant -1.000000e+00 : f32
    %cst_150 = arith.constant 1.000000e+00 : f32
    %628 = vector.broadcast %cst_149 : f32 to vector<8x256xf32>
    %629 = arith.maximumf %628, %627 : vector<8x256xf32>
    %630 = vector.broadcast %cst_150 : f32 to vector<8x256xf32>
    %631 = arith.minimumf %630, %629 : vector<8x256xf32>
    %c0_151 = arith.constant 0 : index
    %c0_152 = arith.constant 0 : index
    %632 = vector.load %arg4[%c0_151, %c0_152] : memref<8x256xf32, #tpu.memory_space<vmem>>, vector<8x256xf32>
    tpu.vector_store %arg4[%c0_151, %c0_152], %631 {strides = array<i32>} : memref<8x256xf32, #tpu.memory_space<vmem>>, vector<8x256xf32>,
    return
  }
}

</mosaic_0001>

<llo_original>
// kernel: run_sampler.1
$region0: #{run_sampler.1}
  #allocation0 [shape = 'u32[]', space=smem, size = 0x4, offset = 0x4, fixed_abs, tag = 'smem constant byte address 0x4 - core index']
  #allocation1 [shape = 'u32[144,128]{1,0:T(1,128)}', space=vmem, size = 0x12000, scoped, tag = 'internal scratch']
  %s0 = inlined_call_operand.hbm [shape: f32[8,256], index: 0, kind: input, shape index: {}, may-alias: {0,4}]
  %s1 = inlined_call_operand.vmem [shape: f32[8,8,1], index: 1, kind: input, shape index: {}]
  %s2 = inlined_call_operand.vmem [shape: f32[8,8,1], index: 2, kind: input, shape index: {}]
  %s3 = inlined_call_operand.vmem [shape: f32[7,8,256], index: 3, kind: input, shape index: {}]
  %s4 = inlined_call_operand.hbm [shape: f32[8,256], index: 4, kind: output, shape index: {}, may-alias: {0,4}]
  %s5 = sld [smem:[#allocation0]]
  $region30: #{run_sampler.1} parent=0
    _
  %s7 = ssub.s32 1, %s5
  %s8 = scalar_select 0, %s7, %s5
  $region1: #{run_sampler.1} parent=0
    #allocation2 [shape = 'u8[8192]{0}', space=vmem, size = 0x2000, scoped, tag = 'input window, operand 0, single buffered']
    #allocation3 [shape = 's32[1]{0}', space=sflag, size = 0x4, scoped, tag = 'scoped memory for run_sampler.1']
    #allocation4 [shape = 's32[1]{0}', space=sflag, size = 0x4, scoped, tag = 'scoped memory for run_sampler.1']
    #allocation5 [shape = 'u8[8192]{0}', space=vmem, size = 0x2000, scoped, tag = 'output window, operand 0, single buffered']
    %9 = vsyncpa [#allocation3], 0
    %10 = vsyncpa [#allocation4], 0
    // Predicated region
    $region2: #{run_sampler.1} parent=1 // pred_check
      _
    $region3: #{run_sampler.1} parent=1 // pred_check_branch
      %12 = sbr.rel (0) target = $region5
    $region4: #{run_sampler.1} parent=1 // pred_region
      %s14 = ssub.s32 256, 256
      %15 = vsyncadd [#allocation3], %s14
      %s17 = sshll.u32 [#allocation2], 4
      %s18 = int_to_ptr.vmem [resolvable:$true] %s17
      %20 = dma.hbm_to_vmem [thread:$0]  %s0, 256, %s18, [#allocation3]
    $region5: #{run_sampler.1} parent=1 // pred_fallthru
      _
    // Predicated region
    $region6: #{run_sampler.1} parent=1 // pred_check
      _
    $region7: #{run_sampler.1} parent=1 // pred_check_branch
      %22 = sbr.rel (0) target = $region9
    $region8: #{run_sampler.1} parent=1 // pred_region
      _
    $region9: #{run_sampler.1} parent=1 // pred_fallthru
      _
    // Predicated region
    $region10: #{run_sampler.1} parent=1 // pred_check
      _
    $region11: #{run_sampler.1} parent=1 // pred_check_branch
      %24 = sbr.rel (0) target = $region13
    $region12: #{run_sampler.1} parent=1 // pred_region
      _
    $region13: #{run_sampler.1} parent=1 // pred_fallthru
      _
    // Predicated region
    $region14: #{run_sampler.1} parent=1 // pred_check
      _
    $region15: #{run_sampler.1} parent=1 // pred_check_branch
      %26 = sbr.rel (0) target = $region17
    $region16: #{run_sampler.1} parent=1 // pred_region
      _
    $region17: #{run_sampler.1} parent=1 // pred_fallthru
      _
    // Predicated region
    $region18: #{run_sampler.1} parent=1 // pred_check
      _
    $region19: #{run_sampler.1} parent=1 // pred_check_branch
      %28 = sbr.rel (0) target = $region21
    $region20: #{run_sampler.1} parent=1 // pred_region
      %29 = dma.done [#allocation3], 256
    $region21: #{run_sampler.1} parent=1 // pred_fallthru
      _
    %v30 = vld [vmem:[#allocation2] sm:$0xff]
    %v31 = vld [vmem:[#allocation2 + $0x8] sm:$0xff]
    %v32 = vld [vmem:[%s1] sm:$0xff]
    %s33 = scalar_lea.vmem %s1, 8
    %v34 = vld [vmem:[%s33] sm:$0xff]
    %s35 = scalar_lea.vmem %s1, 16
    %v36 = vld [vmem:[%s35] sm:$0xff]
    %s37 = scalar_lea.vmem %s1, 24
    %v38 = vld [vmem:[%s37] sm:$0xff]
    %s39 = scalar_lea.vmem %s1, 32
    %v40 = vld [vmem:[%s39] sm:$0xff]
    %s41 = scalar_lea.vmem %s1, 40
    %v42 = vld [vmem:[%s41] sm:$0xff]
    %s43 = scalar_lea.vmem %s1, 48
    %v44 = vld [vmem:[%s43] sm:$0xff]
    %s45 = scalar_lea.vmem %s1, 56
    %v46 = vld [vmem:[%s45] sm:$0xff]
    %v47 = vmul.f32 %v30, 1.0101526
    %v48 = vmul.f32 %v31, 1.0101526
    %v49 = vld [vmem:[%s2] sm:$0xff]
    %v50 = vmul.f32 %v49, 0.07243713
    %52 = vset.pattern.permute.xlu0 0
    %53 = vperm.xlu0 %52, %v50
    %v54 = vpop.permute.xlu0 %53
    %v56 = vsub.f32 %v47, %v54
    %v57 = vsub.f32 %v48, %v54
    %v58 = vlaneseq
    %v59 = vshrl.u32 %v58, 7
    %v60 = vsub.s32 0, %v59
    %v61 = vrot.slane %v30, %v60
    %v62 = vlaneseq
    %v63 = vshrl.u32 %v62, 7
    %v64 = vsub.s32 0, %v63
    %v65 = vrot.slane %v31, %v64
    %v66 = vmul.f32 %v32, 0.07243713
    %68 = vset.pattern.permute.xlu0 0
    %69 = vperm.xlu0 %68, %v66
    %v70 = vpop.permute.xlu0 %69
    %v72 = vmul.f32 %v70, %v61
    %v73 = vmul.f32 %v70, %v65
    %v74 = vsub.f32 %v56, %v72
    %v75 = vsub.f32 %v57, %v73
    %v76 = vlaneseq
    %v77 = vshrl.u32 %v76, 7
    %v78 = vsub.s32 1, %v77
    %v79 = vrot.slane %v30, %v78
    %v80 = vlaneseq
    %v81 = vshrl.u32 %v80, 7
    %v82 = vsub.s32 1, %v81
    %v83 = vrot.slane %v31, %v82
    %v84 = vmul.f32 %v34, 0.07243713
    %86 = vset.pattern.permute.xlu0 0
    %87 = vperm.xlu0 %86, %v84
    %v88 = vpop.permute.xlu0 %87
    %v90 = vmul.f32 %v88, %v79
    %v91 = vmul.f32 %v88, %v83
    %v92 = vsub.f32 %v74, %v90
    %v93 = vsub.f32 %v75, %v91
    %v94 = vlaneseq
    %v95 = vshrl.u32 %v94, 7
    %v96 = vsub.s32 2, %v95
    %v97 = vrot.slane %v30, %v96
    %v98 = vlaneseq
    %v99 = vshrl.u32 %v98, 7
    %v100 = vsub.s32 2, %v99
    %v101 = vrot.slane %v31, %v100
    %v102 = vmul.f32 %v36, 0.07243713
    %104 = vset.pattern.permute.xlu0 0
    %105 = vperm.xlu0 %104, %v102
    %v106 = vpop.permute.xlu0 %105
    %v108 = vmul.f32 %v106, %v97
    %v109 = vmul.f32 %v106, %v101
    %v110 = vsub.f32 %v92, %v108
    %v111 = vsub.f32 %v93, %v109
    %v112 = vlaneseq
    %v113 = vshrl.u32 %v112, 7
    %v114 = vsub.s32 3, %v113
    %v115 = vrot.slane %v30, %v114
    %v116 = vlaneseq
    %v117 = vshrl.u32 %v116, 7
    %v118 = vsub.s32 3, %v117
    %v119 = vrot.slane %v31, %v118
    %v120 = vmul.f32 %v38, 0.07243713
    %122 = vset.pattern.permute.xlu0 0
    %123 = vperm.xlu0 %122, %v120
    %v124 = vpop.permute.xlu0 %123
    %v126 = vmul.f32 %v124, %v115
    %v127 = vmul.f32 %v124, %v119
    %v128 = vsub.f32 %v110, %v126
    %v129 = vsub.f32 %v111, %v127
    %v130 = vlaneseq
    %v131 = vshrl.u32 %v130, 7
    %v132 = vsub.s32 4, %v131
    %v133 = vrot.slane %v30, %v132
    %v134 = vlaneseq
    %v135 = vshrl.u32 %v134, 7
    %v136 = vsub.s32 4, %v135
    %v137 = vrot.slane %v31, %v136
    %v138 = vmul.f32 %v40, 0.07243713
    %140 = vset.pattern.permute.xlu0 0
    %141 = vperm.xlu0 %140, %v138
    %v142 = vpop.permute.xlu0 %141
    %v144 = vmul.f32 %v142, %v133
    %v145 = vmul.f32 %v142, %v137
    %v146 = vsub.f32 %v128, %v144
    %v147 = vsub.f32 %v129, %v145
    %v148 = vlaneseq
    %v149 = vshrl.u32 %v148, 7
    %v150 = vsub.s32 5, %v149
    %v151 = vrot.slane %v30, %v150
    %v152 = vlaneseq
    %v153 = vshrl.u32 %v152, 7
    %v154 = vsub.s32 5, %v153
    %v155 = vrot.slane %v31, %v154
    %v156 = vmul.f32 %v42, 0.07243713
    %158 = vset.pattern.permute.xlu0 0
    %159 = vperm.xlu0 %158, %v156
    %v160 = vpop.permute.xlu0 %159
    %v162 = vmul.f32 %v160, %v151
    %v163 = vmul.f32 %v160, %v155
    %v164 = vsub.f32 %v146, %v162
    %v165 = vsub.f32 %v147, %v163
    %v166 = vlaneseq
    %v167 = vshrl.u32 %v166, 7
    %v168 = vsub.s32 6, %v167
    %v169 = vrot.slane %v30, %v168
    %v170 = vlaneseq
    %v171 = vshrl.u32 %v170, 7
    %v172 = vsub.s32 6, %v171
    %v173 = vrot.slane %v31, %v172
    %v174 = vmul.f32 %v44, 0.07243713
    %176 = vset.pattern.permute.xlu0 0
    %177 = vperm.xlu0 %176, %v174
    %v178 = vpop.permute.xlu0 %177
    %v180 = vmul.f32 %v178, %v169
    %v181 = vmul.f32 %v178, %v173
    %v182 = vsub.f32 %v164, %v180
    %v183 = vsub.f32 %v165, %v181
    %v184 = vlaneseq
    %v185 = vshrl.u32 %v184, 7
    %v186 = vsub.s32 7, %v185
    %v187 = vrot.slane %v30, %v186
    %v188 = vlaneseq
    %v189 = vshrl.u32 %v188, 7
    %v190 = vsub.s32 7, %v189
    %v191 = vrot.slane %v31, %v190
    %v192 = vmul.f32 %v46, 0.07243713
    %194 = vset.pattern.permute.xlu0 0
    %195 = vperm.xlu0 %194, %v192
    %v196 = vpop.permute.xlu0 %195
    %v198 = vmul.f32 %v196, %v187
    %v199 = vmul.f32 %v196, %v191
    %v200 = vsub.f32 %v182, %v198
    %v201 = vsub.f32 %v183, %v199
    %v202 = vld [vmem:[%s3] sm:$0xff]
    %v203 = vld [vmem:[%s3 + $0x8] sm:$0xff]
    %v204 = vmul.f32 %v202, 0.14142136
    %v205 = vmul.f32 %v203, 0.14142136
    %v206 = vadd.f32 %v200, %v204
    %v207 = vadd.f32 %v201, %v205
    %v208 = vmul.f32 %v206, 1.0086906
    %v209 = vmul.f32 %v207, 1.0086906
    %s210 = scalar_lea.vmem %s2, 8
    %v211 = vld [vmem:[%s210] sm:$0xff]
    %v212 = vmul.f32 %v211, 0.07126854
    %214 = vset.pattern.permute.xlu0 0
    %215 = vperm.xlu0 %214, %v212
    %v216 = vpop.permute.xlu0 %215
    %v218 = vsub.f32 %v208, %v216
    %v219 = vsub.f32 %v209, %v216
    %v220 = vlaneseq
    %v221 = vshrl.u32 %v220, 7
    %v222 = vsub.s32 0, %v221
    %v223 = vrot.slane %v206, %v222
    %v224 = vlaneseq
    %v225 = vshrl.u32 %v224, 7
    %v226 = vsub.s32 0, %v225
    %v227 = vrot.slane %v207, %v226
    %v228 = vmul.f32 %v32, 0.07126854
    %230 = vset.pattern.permute.xlu0 0
    %231 = vperm.xlu0 %230, %v228
    %v232 = vpop.permute.xlu0 %231
    %v234 = vmul.f32 %v232, %v223
    %v235 = vmul.f32 %v232, %v227
    %v236 = vsub.f32 %v218, %v234
    %v237 = vsub.f32 %v219, %v235
    %v238 = vlaneseq
    %v239 = vshrl.u32 %v238, 7
    %v240 = vsub.s32 1, %v239
    %v241 = vrot.slane %v206, %v240
    %v242 = vlaneseq
    %v243 = vshrl.u32 %v242, 7
    %v244 = vsub.s32 1, %v243
    %v245 = vrot.slane %v207, %v244
    %v246 = vmul.f32 %v34, 0.07126854
    %248 = vset.pattern.permute.xlu0 0
    %249 = vperm.xlu0 %248, %v246
    %v250 = vpop.permute.xlu0 %249
    %v252 = vmul.f32 %v250, %v241
    %v253 = vmul.f32 %v250, %v245
    %v254 = vsub.f32 %v236, %v252
    %v255 = vsub.f32 %v237, %v253
    %v256 = vlaneseq
    %v257 = vshrl.u32 %v256, 7
    %v258 = vsub.s32 2, %v257
    %v259 = vrot.slane %v206, %v258
    %v260 = vlaneseq
    %v261 = vshrl.u32 %v260, 7
    %v262 = vsub.s32 2, %v261
    %v263 = vrot.slane %v207, %v262
    %v264 = vmul.f32 %v36, 0.07126854
    %266 = vset.pattern.permute.xlu0 0
    %267 = vperm.xlu0 %266, %v264
    %v268 = vpop.permute.xlu0 %267
    %v270 = vmul.f32 %v268, %v259
    %v271 = vmul.f32 %v268, %v263
    %v272 = vsub.f32 %v254, %v270
    %v273 = vsub.f32 %v255, %v271
    %v274 = vlaneseq
    %v275 = vshrl.u32 %v274, 7
    %v276 = vsub.s32 3, %v275
    %v277 = vrot.slane %v206, %v276
    %v278 = vlaneseq
    %v279 = vshrl.u32 %v278, 7
    %v280 = vsub.s32 3, %v279
    %v281 = vrot.slane %v207, %v280
    %v282 = vmul.f32 %v38, 0.07126854
    %284 = vset.pattern.permute.xlu0 0
    %285 = vperm.xlu0 %284, %v282
    %v286 = vpop.permute.xlu0 %285
    %v288 = vmul.f32 %v286, %v277
    %v289 = vmul.f32 %v286, %v281
    %v290 = vsub.f32 %v272, %v288
    %v291 = vsub.f32 %v273, %v289
    %v292 = vlaneseq
    %v293 = vshrl.u32 %v292, 7
    %v294 = vsub.s32 4, %v293
    %v295 = vrot.slane %v206, %v294
    %v296 = vlaneseq
    %v297 = vshrl.u32 %v296, 7
    %v298 = vsub.s32 4, %v297
    %v299 = vrot.slane %v207, %v298
    %v300 = vmul.f32 %v40, 0.07126854
    %302 = vset.pattern.permute.xlu0 0
    %303 = vperm.xlu0 %302, %v300
    %v304 = vpop.permute.xlu0 %303
    %v306 = vmul.f32 %v304, %v295
    %v307 = vmul.f32 %v304, %v299
    %v308 = vsub.f32 %v290, %v306
    %v309 = vsub.f32 %v291, %v307
    %v310 = vlaneseq
    %v311 = vshrl.u32 %v310, 7
    %v312 = vsub.s32 5, %v311
    %v313 = vrot.slane %v206, %v312
    %v314 = vlaneseq
    %v315 = vshrl.u32 %v314, 7
    %v316 = vsub.s32 5, %v315
    %v317 = vrot.slane %v207, %v316
    %v318 = vmul.f32 %v42, 0.07126854
    %320 = vset.pattern.permute.xlu0 0
    %321 = vperm.xlu0 %320, %v318
    %v322 = vpop.permute.xlu0 %321
    %v324 = vmul.f32 %v322, %v313
    %v325 = vmul.f32 %v322, %v317
    %v326 = vsub.f32 %v308, %v324
    %v327 = vsub.f32 %v309, %v325
    %v328 = vlaneseq
    %v329 = vshrl.u32 %v328, 7
    %v330 = vsub.s32 6, %v329
    %v331 = vrot.slane %v206, %v330
    %v332 = vlaneseq
    %v333 = vshrl.u32 %v332, 7
    %v334 = vsub.s32 6, %v333
    %v335 = vrot.slane %v207, %v334
    %v336 = vmul.f32 %v44, 0.07126854
    %338 = vset.pattern.permute.xlu0 0
    %339 = vperm.xlu0 %338, %v336
    %v340 = vpop.permute.xlu0 %339
    %v342 = vmul.f32 %v340, %v331
    %v343 = vmul.f32 %v340, %v335
    %v344 = vsub.f32 %v326, %v342
    %v345 = vsub.f32 %v327, %v343
    %v346 = vlaneseq
    %v347 = vshrl.u32 %v346, 7
    %v348 = vsub.s32 7, %v347
    %v349 = vrot.slane %v206, %v348
    %v350 = vlaneseq
    %v351 = vshrl.u32 %v350, 7
    %v352 = vsub.s32 7, %v351
    %v353 = vrot.slane %v207, %v352
    %v354 = vmul.f32 %v46, 0.07126854
    %356 = vset.pattern.permute.xlu0 0
    %357 = vperm.xlu0 %356, %v354
    %v358 = vpop.permute.xlu0 %357
    %v360 = vmul.f32 %v358, %v349
    %v361 = vmul.f32 %v358, %v353
    %v362 = vsub.f32 %v344, %v360
    %v363 = vsub.f32 %v345, %v361
    %s364 = scalar_lea.vmem %s3, 16
    %v365 = vld [vmem:[%s364] sm:$0xff]
    %v366 = vld [vmem:[%s364 + $0x8] sm:$0xff]
    %v367 = vmul.f32 %v365, 0.13098527
    %v368 = vmul.f32 %v366, 0.13098527
    %v369 = vadd.f32 %v362, %v367
    %v370 = vadd.f32 %v363, %v368
    %v371 = vmul.f32 %v369, 1.0072349
    %v372 = vmul.f32 %v370, 1.0072349
    %s373 = scalar_lea.vmem %s2, 16
    %v374 = vld [vmem:[%s373] sm:$0xff]
    %v375 = vmul.f32 %v374, 0.06990407
    %377 = vset.pattern.permute.xlu0 0
    %378 = vperm.xlu0 %377, %v375
    %v379 = vpop.permute.xlu0 %378
    %v381 = vsub.f32 %v371, %v379
    %v382 = vsub.f32 %v372, %v379
    %v383 = vlaneseq
    %v384 = vshrl.u32 %v383, 7
    %v385 = vsub.s32 0, %v384
    %v386 = vrot.slane %v369, %v385
    %v387 = vlaneseq
    %v388 = vshrl.u32 %v387, 7
    %v389 = vsub.s32 0, %v388
    %v390 = vrot.slane %v370, %v389
    %v391 = vmul.f32 %v32, 0.06990407
    %393 = vset.pattern.permute.xlu0 0
    %394 = vperm.xlu0 %393, %v391
    %v395 = vpop.permute.xlu0 %394
    %v397 = vmul.f32 %v395, %v386
    %v398 = vmul.f32 %v395, %v390
    %v399 = vsub.f32 %v381, %v397
    %v400 = vsub.f32 %v382, %v398
    %v401 = vlaneseq
    %v402 = vshrl.u32 %v401, 7
    %v403 = vsub.s32 1, %v402
    %v404 = vrot.slane %v369, %v403
    %v405 = vlaneseq
    %v406 = vshrl.u32 %v405, 7
    %v407 = vsub.s32 1, %v406
    %v408 = vrot.slane %v370, %v407
    %v409 = vmul.f32 %v34, 0.06990407
    %411 = vset.pattern.permute.xlu0 0
    %412 = vperm.xlu0 %411, %v409
    %v413 = vpop.permute.xlu0 %412
    %v415 = vmul.f32 %v413, %v404
    %v416 = vmul.f32 %v413, %v408
    %v417 = vsub.f32 %v399, %v415
    %v418 = vsub.f32 %v400, %v416
    %v419 = vlaneseq
    %v420 = vshrl.u32 %v419, 7
    %v421 = vsub.s32 2, %v420
    %v422 = vrot.slane %v369, %v421
    %v423 = vlaneseq
    %v424 = vshrl.u32 %v423, 7
    %v425 = vsub.s32 2, %v424
    %v426 = vrot.slane %v370, %v425
    %v427 = vmul.f32 %v36, 0.06990407
    %429 = vset.pattern.permute.xlu0 0
    %430 = vperm.xlu0 %429, %v427
    %v431 = vpop.permute.xlu0 %430
    %v433 = vmul.f32 %v431, %v422
    %v434 = vmul.f32 %v431, %v426
    %v435 = vsub.f32 %v417, %v433
    %v436 = vsub.f32 %v418, %v434
    %v437 = vlaneseq
    %v438 = vshrl.u32 %v437, 7
    %v439 = vsub.s32 3, %v438
    %v440 = vrot.slane %v369, %v439
    %v441 = vlaneseq
    %v442 = vshrl.u32 %v441, 7
    %v443 = vsub.s32 3, %v442
    %v444 = vrot.slane %v370, %v443
    %v445 = vmul.f32 %v38, 0.06990407
    %447 = vset.pattern.permute.xlu0 0
    %448 = vperm.xlu0 %447, %v445
    %v449 = vpop.permute.xlu0 %448
    %v451 = vmul.f32 %v449, %v440
    %v452 = vmul.f32 %v449, %v444
    %v453 = vsub.f32 %v435, %v451
    %v454 = vsub.f32 %v436, %v452
    %v455 = vlaneseq
    %v456 = vshrl.u32 %v455, 7
    %v457 = vsub.s32 4, %v456
    %v458 = vrot.slane %v369, %v457
    %v459 = vlaneseq
    %v460 = vshrl.u32 %v459, 7
    %v461 = vsub.s32 4, %v460
    %v462 = vrot.slane %v370, %v461
    %v463 = vmul.f32 %v40, 0.06990407
    %465 = vset.pattern.permute.xlu0 0
    %466 = vperm.xlu0 %465, %v463
    %v467 = vpop.permute.xlu0 %466
    %v469 = vmul.f32 %v467, %v458
    %v470 = vmul.f32 %v467, %v462
    %v471 = vsub.f32 %v453, %v469
    %v472 = vsub.f32 %v454, %v470
    %v473 = vlaneseq
    %v474 = vshrl.u32 %v473, 7
    %v475 = vsub.s32 5, %v474
    %v476 = vrot.slane %v369, %v475
    %v477 = vlaneseq
    %v478 = vshrl.u32 %v477, 7
    %v479 = vsub.s32 5, %v478
    %v480 = vrot.slane %v370, %v479
    %v481 = vmul.f32 %v42, 0.06990407
    %483 = vset.pattern.permute.xlu0 0
    %484 = vperm.xlu0 %483, %v481
    %v485 = vpop.permute.xlu0 %484
    %v487 = vmul.f32 %v485, %v476
    %v488 = vmul.f32 %v485, %v480
    %v489 = vsub.f32 %v471, %v487
    %v490 = vsub.f32 %v472, %v488
    %v491 = vlaneseq
    %v492 = vshrl.u32 %v491, 7
    %v493 = vsub.s32 6, %v492
    %v494 = vrot.slane %v369, %v493
    %v495 = vlaneseq
    %v496 = vshrl.u32 %v495, 7
    %v497 = vsub.s32 6, %v496
    %v498 = vrot.slane %v370, %v497
    %v499 = vmul.f32 %v44, 0.06990407
    %501 = vset.pattern.permute.xlu0 0
    %502 = vperm.xlu0 %501, %v499
    %v503 = vpop.permute.xlu0 %502
    %v505 = vmul.f32 %v503, %v494
    %v506 = vmul.f32 %v503, %v498
    %v507 = vsub.f32 %v489, %v505
    %v508 = vsub.f32 %v490, %v506
    %v509 = vlaneseq
    %v510 = vshrl.u32 %v509, 7
    %v511 = vsub.s32 7, %v510
    %v512 = vrot.slane %v369, %v511
    %v513 = vlaneseq
    %v514 = vshrl.u32 %v513, 7
    %v515 = vsub.s32 7, %v514
    %v516 = vrot.slane %v370, %v515
    %v517 = vmul.f32 %v46, 0.06990407
    %519 = vset.pattern.permute.xlu0 0
    %520 = vperm.xlu0 %519, %v517
    %v521 = vpop.permute.xlu0 %520
    %v523 = vmul.f32 %v521, %v512
    %v524 = vmul.f32 %v521, %v516
    %v525 = vsub.f32 %v507, %v523
    %v526 = vsub.f32 %v508, %v524
    %s527 = scalar_lea.vmem %s3, 32
    %v528 = vld [vmem:[%s527] sm:$0xff]
    %v529 = vld [vmem:[%s527 + $0x8] sm:$0xff]
    %v530 = vmul.f32 %v528, 0.119642325
    %v531 = vmul.f32 %v529, 0.119642325
    %v532 = vadd.f32 %v525, %v530
    %v533 = vadd.f32 %v526, %v531
    %v534 = vmul.f32 %v532, 1.0057856
    %v535 = vmul.f32 %v533, 1.0057856
    %s536 = scalar_lea.vmem %s2, 24
    %v537 = vld [vmem:[%s536] sm:$0xff]
    %v538 = vmul.f32 %v537, 0.068182155
    %540 = vset.pattern.permute.xlu0 0
    %541 = vperm.xlu0 %540, %v538
    %v542 = vpop.permute.xlu0 %541
    %v544 = vsub.f32 %v534, %v542
    %v545 = vsub.f32 %v535, %v542
    %v546 = vlaneseq
    %v547 = vshrl.u32 %v546, 7
    %v548 = vsub.s32 0, %v547
    %v549 = vrot.slane %v532, %v548
    %v550 = vlaneseq
    %v551 = vshrl.u32 %v550, 7
    %v552 = vsub.s32 0, %v551
    %v553 = vrot.slane %v533, %v552
    %v554 = vmul.f32 %v32, 0.068182155
    %556 = vset.pattern.permute.xlu0 0
    %557 = vperm.xlu0 %556, %v554
    %v558 = vpop.permute.xlu0 %557
    %v560 = vmul.f32 %v558, %v549
    %v561 = vmul.f32 %v558, %v553
    %v562 = vsub.f32 %v544, %v560
    %v563 = vsub.f32 %v545, %v561
    %v564 = vlaneseq
    %v565 = vshrl.u32 %v564, 7
    %v566 = vsub.s32 1, %v565
    %v567 = vrot.slane %v532, %v566
    %v568 = vlaneseq
    %v569 = vshrl.u32 %v568, 7
    %v570 = vsub.s32 1, %v569
    %v571 = vrot.slane %v533, %v570
    %v572 = vmul.f32 %v34, 0.068182155
    %574 = vset.pattern.permute.xlu0 0
    %575 = vperm.xlu0 %574, %v572
    %v576 = vpop.permute.xlu0 %575
    %v578 = vmul.f32 %v576, %v567
    %v579 = vmul.f32 %v576, %v571
    %v580 = vsub.f32 %v562, %v578
    %v581 = vsub.f32 %v563, %v579
    %v582 = vlaneseq
    %v583 = vshrl.u32 %v582, 7
    %v584 = vsub.s32 2, %v583
    %v585 = vrot.slane %v532, %v584
    %v586 = vlaneseq
    %v587 = vshrl.u32 %v586, 7
    %v588 = vsub.s32 2, %v587
    %v589 = vrot.slane %v533, %v588
    %v590 = vmul.f32 %v36, 0.068182155
    %592 = vset.pattern.permute.xlu0 0
    %593 = vperm.xlu0 %592, %v590
    %v594 = vpop.permute.xlu0 %593
    %v596 = vmul.f32 %v594, %v585
    %v597 = vmul.f32 %v594, %v589
    %v598 = vsub.f32 %v580, %v596
    %v599 = vsub.f32 %v581, %v597
    %v600 = vlaneseq
    %v601 = vshrl.u32 %v600, 7
    %v602 = vsub.s32 3, %v601
    %v603 = vrot.slane %v532, %v602
    %v604 = vlaneseq
    %v605 = vshrl.u32 %v604, 7
    %v606 = vsub.s32 3, %v605
    %v607 = vrot.slane %v533, %v606
    %v608 = vmul.f32 %v38, 0.068182155
    %610 = vset.pattern.permute.xlu0 0
    %611 = vperm.xlu0 %610, %v608
    %v612 = vpop.permute.xlu0 %611
    %v614 = vmul.f32 %v612, %v603
    %v615 = vmul.f32 %v612, %v607
    %v616 = vsub.f32 %v598, %v614
    %v617 = vsub.f32 %v599, %v615
    %v618 = vlaneseq
    %v619 = vshrl.u32 %v618, 7
    %v620 = vsub.s32 4, %v619
    %v621 = vrot.slane %v532, %v620
    %v622 = vlaneseq
    %v623 = vshrl.u32 %v622, 7
    %v624 = vsub.s32 4, %v623
    %v625 = vrot.slane %v533, %v624
    %v626 = vmul.f32 %v40, 0.068182155
    %628 = vset.pattern.permute.xlu0 0
    %629 = vperm.xlu0 %628, %v626
    %v630 = vpop.permute.xlu0 %629
    %v632 = vmul.f32 %v630, %v621
    %v633 = vmul.f32 %v630, %v625
    %v634 = vsub.f32 %v616, %v632
    %v635 = vsub.f32 %v617, %v633
    %v636 = vlaneseq
    %v637 = vshrl.u32 %v636, 7
    %v638 = vsub.s32 5, %v637
    %v639 = vrot.slane %v532, %v638
    %v640 = vlaneseq
    %v641 = vshrl.u32 %v640, 7
    %v642 = vsub.s32 5, %v641
    %v643 = vrot.slane %v533, %v642
    %v644 = vmul.f32 %v42, 0.068182155
    %646 = vset.pattern.permute.xlu0 0
    %647 = vperm.xlu0 %646, %v644
    %v648 = vpop.permute.xlu0 %647
    %v650 = vmul.f32 %v648, %v639
    %v651 = vmul.f32 %v648, %v643
    %v652 = vsub.f32 %v634, %v650
    %v653 = vsub.f32 %v635, %v651
    %v654 = vlaneseq
    %v655 = vshrl.u32 %v654, 7
    %v656 = vsub.s32 6, %v655
    %v657 = vrot.slane %v532, %v656
    %v658 = vlaneseq
    %v659 = vshrl.u32 %v658, 7
    %v660 = vsub.s32 6, %v659
    %v661 = vrot.slane %v533, %v660
    %v662 = vmul.f32 %v44, 0.068182155
    %664 = vset.pattern.permute.xlu0 0
    %665 = vperm.xlu0 %664, %v662
    %v666 = vpop.permute.xlu0 %665
    %v668 = vmul.f32 %v666, %v657
    %v669 = vmul.f32 %v666, %v661
    %v670 = vsub.f32 %v652, %v668
    %v671 = vsub.f32 %v653, %v669
    %v672 = vlaneseq
    %v673 = vshrl.u32 %v672, 7
    %v674 = vsub.s32 7, %v673
    %v675 = vrot.slane %v532, %v674
    %v676 = vlaneseq
    %v677 = vshrl.u32 %v676, 7
    %v678 = vsub.s32 7, %v677
    %v679 = vrot.slane %v533, %v678
    %v680 = vmul.f32 %v46, 0.068182155
    %682 = vset.pattern.permute.xlu0 0
    %683 = vperm.xlu0 %682, %v680
    %v684 = vpop.permute.xlu0 %683
    %v686 = vmul.f32 %v684, %v675
    %v687 = vmul.f32 %v684, %v679
    %v688 = vsub.f32 %v670, %v686
    %v689 = vsub.f32 %v671, %v687
    %s690 = scalar_lea.vmem %s3, 48
    %v691 = vld [vmem:[%s690] sm:$0xff]
    %v692 = vld [vmem:[%s690 + $0x8] sm:$0xff]
    %v693 = vmul.f32 %v691, 0.107104756
    %v694 = vmul.f32 %v692, 0.107104756
    %v695 = vadd.f32 %v688, %v693
    %v696 = vadd.f32 %v689, %v694
    %v697 = vmul.f32 %v695, 1.0043424
    %v698 = vmul.f32 %v696, 1.0043424
    %s699 = scalar_lea.vmem %s2, 32
    %v700 = vld [vmem:[%s699] sm:$0xff]
    %v701 = vmul.f32 %v700, 0.065766625
    %703 = vset.pattern.permute.xlu0 0
    %704 = vperm.xlu0 %703, %v701
    %v705 = vpop.permute.xlu0 %704
    %v707 = vsub.f32 %v697, %v705
    %v708 = vsub.f32 %v698, %v705
    %v709 = vlaneseq
    %v710 = vshrl.u32 %v709, 7
    %v711 = vsub.s32 0, %v710
    %v712 = vrot.slane %v695, %v711
    %v713 = vlaneseq
    %v714 = vshrl.u32 %v713, 7
    %v715 = vsub.s32 0, %v714
    %v716 = vrot.slane %v696, %v715
    %v717 = vmul.f32 %v32, 0.065766625
    %719 = vset.pattern.permute.xlu0 0
    %720 = vperm.xlu0 %719, %v717
    %v721 = vpop.permute.xlu0 %720
    %v723 = vmul.f32 %v721, %v712
    %v724 = vmul.f32 %v721, %v716
    %v725 = vsub.f32 %v707, %v723
    %v726 = vsub.f32 %v708, %v724
    %v727 = vlaneseq
    %v728 = vshrl.u32 %v727, 7
    %v729 = vsub.s32 1, %v728
    %v730 = vrot.slane %v695, %v729
    %v731 = vlaneseq
    %v732 = vshrl.u32 %v731, 7
    %v733 = vsub.s32 1, %v732
    %v734 = vrot.slane %v696, %v733
    %v735 = vmul.f32 %v34, 0.065766625
    %737 = vset.pattern.permute.xlu0 0
    %738 = vperm.xlu0 %737, %v735
    %v739 = vpop.permute.xlu0 %738
    %v741 = vmul.f32 %v739, %v730
    %v742 = vmul.f32 %v739, %v734
    %v743 = vsub.f32 %v725, %v741
    %v744 = vsub.f32 %v726, %v742
    %v745 = vlaneseq
    %v746 = vshrl.u32 %v745, 7
    %v747 = vsub.s32 2, %v746
    %v748 = vrot.slane %v695, %v747
    %v749 = vlaneseq
    %v750 = vshrl.u32 %v749, 7
    %v751 = vsub.s32 2, %v750
    %v752 = vrot.slane %v696, %v751
    %v753 = vmul.f32 %v36, 0.065766625
    %755 = vset.pattern.permute.xlu0 0
    %756 = vperm.xlu0 %755, %v753
    %v757 = vpop.permute.xlu0 %756
    %v759 = vmul.f32 %v757, %v748
    %v760 = vmul.f32 %v757, %v752
    %v761 = vsub.f32 %v743, %v759
    %v762 = vsub.f32 %v744, %v760
    %v763 = vlaneseq
    %v764 = vshrl.u32 %v763, 7
    %v765 = vsub.s32 3, %v764
    %v766 = vrot.slane %v695, %v765
    %v767 = vlaneseq
    %v768 = vshrl.u32 %v767, 7
    %v769 = vsub.s32 3, %v768
    %v770 = vrot.slane %v696, %v769
    %v771 = vmul.f32 %v38, 0.065766625
    %773 = vset.pattern.permute.xlu0 0
    %774 = vperm.xlu0 %773, %v771
    %v775 = vpop.permute.xlu0 %774
    %v777 = vmul.f32 %v775, %v766
    %v778 = vmul.f32 %v775, %v770
    %v779 = vsub.f32 %v761, %v777
    %v780 = vsub.f32 %v762, %v778
    %v781 = vlaneseq
    %v782 = vshrl.u32 %v781, 7
    %v783 = vsub.s32 4, %v782
    %v784 = vrot.slane %v695, %v783
    %v785 = vlaneseq
    %v786 = vshrl.u32 %v785, 7
    %v787 = vsub.s32 4, %v786
    %v788 = vrot.slane %v696, %v787
    %v789 = vmul.f32 %v40, 0.065766625
    %791 = vset.pattern.permute.xlu0 0
    %792 = vperm.xlu0 %791, %v789
    %v793 = vpop.permute.xlu0 %792
    %v795 = vmul.f32 %v793, %v784
    %v796 = vmul.f32 %v793, %v788
    %v797 = vsub.f32 %v779, %v795
    %v798 = vsub.f32 %v780, %v796
    %v799 = vlaneseq
    %v800 = vshrl.u32 %v799, 7
    %v801 = vsub.s32 5, %v800
    %v802 = vrot.slane %v695, %v801
    %v803 = vlaneseq
    %v804 = vshrl.u32 %v803, 7
    %v805 = vsub.s32 5, %v804
    %v806 = vrot.slane %v696, %v805
    %v807 = vmul.f32 %v42, 0.065766625
    %809 = vset.pattern.permute.xlu0 0
    %810 = vperm.xlu0 %809, %v807
    %v811 = vpop.permute.xlu0 %810
    %v813 = vmul.f32 %v811, %v802
    %v814 = vmul.f32 %v811, %v806
    %v815 = vsub.f32 %v797, %v813
    %v816 = vsub.f32 %v798, %v814
    %v817 = vlaneseq
    %v818 = vshrl.u32 %v817, 7
    %v819 = vsub.s32 6, %v818
    %v820 = vrot.slane %v695, %v819
    %v821 = vlaneseq
    %v822 = vshrl.u32 %v821, 7
    %v823 = vsub.s32 6, %v822
    %v824 = vrot.slane %v696, %v823
    %v825 = vmul.f32 %v44, 0.065766625
    %827 = vset.pattern.permute.xlu0 0
    %828 = vperm.xlu0 %827, %v825
    %v829 = vpop.permute.xlu0 %828
    %v831 = vmul.f32 %v829, %v820
    %v832 = vmul.f32 %v829, %v824
    %v833 = vsub.f32 %v815, %v831
    %v834 = vsub.f32 %v816, %v832
    %v835 = vlaneseq
    %v836 = vshrl.u32 %v835, 7
    %v837 = vsub.s32 7, %v836
    %v838 = vrot.slane %v695, %v837
    %v839 = vlaneseq
    %v840 = vshrl.u32 %v839, 7
    %v841 = vsub.s32 7, %v840
    %v842 = vrot.slane %v696, %v841
    %v843 = vmul.f32 %v46, 0.065766625
    %845 = vset.pattern.permute.xlu0 0
    %846 = vperm.xlu0 %845, %v843
    %v847 = vpop.permute.xlu0 %846
    %v849 = vmul.f32 %v847, %v838
    %v850 = vmul.f32 %v847, %v842
    %v851 = vsub.f32 %v833, %v849
    %v852 = vsub.f32 %v834, %v850
    %s853 = scalar_lea.vmem %s3, 64
    %v854 = vld [vmem:[%s853] sm:$0xff]
    %v855 = vld [vmem:[%s853 + $0x8] sm:$0xff]
    %v856 = vmul.f32 %v854, 0.092890106
    %v857 = vmul.f32 %v855, 0.092890106
    %v858 = vadd.f32 %v851, %v856
    %v859 = vadd.f32 %v852, %v857
    %v860 = vmul.f32 %v858, 1.0029055
    %v861 = vmul.f32 %v859, 1.0029055
    %s862 = scalar_lea.vmem %s2, 40
    %v863 = vld [vmem:[%s862] sm:$0xff]
    %v864 = vmul.f32 %v863, 0.06181764
    %866 = vset.pattern.permute.xlu0 0
    %867 = vperm.xlu0 %866, %v864
    %v868 = vpop.permute.xlu0 %867
    %v870 = vsub.f32 %v860, %v868
    %v871 = vsub.f32 %v861, %v868
    %v872 = vlaneseq
    %v873 = vshrl.u32 %v872, 7
    %v874 = vsub.s32 0, %v873
    %v875 = vrot.slane %v858, %v874
    %v876 = vlaneseq
    %v877 = vshrl.u32 %v876, 7
    %v878 = vsub.s32 0, %v877
    %v879 = vrot.slane %v859, %v878
    %v880 = vmul.f32 %v32, 0.06181764
    %882 = vset.pattern.permute.xlu0 0
    %883 = vperm.xlu0 %882, %v880
    %v884 = vpop.permute.xlu0 %883
    %v886 = vmul.f32 %v884, %v875
    %v887 = vmul.f32 %v884, %v879
    %v888 = vsub.f32 %v870, %v886
    %v889 = vsub.f32 %v871, %v887
    %v890 = vlaneseq
    %v891 = vshrl.u32 %v890, 7
    %v892 = vsub.s32 1, %v891
    %v893 = vrot.slane %v858, %v892
    %v894 = vlaneseq
    %v895 = vshrl.u32 %v894, 7
    %v896 = vsub.s32 1, %v895
    %v897 = vrot.slane %v859, %v896
    %v898 = vmul.f32 %v34, 0.06181764
    %900 = vset.pattern.permute.xlu0 0
    %901 = vperm.xlu0 %900, %v898
    %v902 = vpop.permute.xlu0 %901
    %v904 = vmul.f32 %v902, %v893
    %v905 = vmul.f32 %v902, %v897
    %v906 = vsub.f32 %v888, %v904
    %v907 = vsub.f32 %v889, %v905
    %v908 = vlaneseq
    %v909 = vshrl.u32 %v908, 7
    %v910 = vsub.s32 2, %v909
    %v911 = vrot.slane %v858, %v910
    %v912 = vlaneseq
    %v913 = vshrl.u32 %v912, 7
    %v914 = vsub.s32 2, %v913
    %v915 = vrot.slane %v859, %v914
    %v916 = vmul.f32 %v36, 0.06181764
    %918 = vset.pattern.permute.xlu0 0
    %919 = vperm.xlu0 %918, %v916
    %v920 = vpop.permute.xlu0 %919
    %v922 = vmul.f32 %v920, %v911
    %v923 = vmul.f32 %v920, %v915
    %v924 = vsub.f32 %v906, %v922
    %v925 = vsub.f32 %v907, %v923
    %v926 = vlaneseq
    %v927 = vshrl.u32 %v926, 7
    %v928 = vsub.s32 3, %v927
    %v929 = vrot.slane %v858, %v928
    %v930 = vlaneseq
    %v931 = vshrl.u32 %v930, 7
    %v932 = vsub.s32 3, %v931
    %v933 = vrot.slane %v859, %v932
    %v934 = vmul.f32 %v38, 0.06181764
    %936 = vset.pattern.permute.xlu0 0
    %937 = vperm.xlu0 %936, %v934
    %v938 = vpop.permute.xlu0 %937
    %v940 = vmul.f32 %v938, %v929
    %v941 = vmul.f32 %v938, %v933
    %v942 = vsub.f32 %v924, %v940
    %v943 = vsub.f32 %v925, %v941
    %v944 = vlaneseq
    %v945 = vshrl.u32 %v944, 7
    %v946 = vsub.s32 4, %v945
    %v947 = vrot.slane %v858, %v946
    %v948 = vlaneseq
    %v949 = vshrl.u32 %v948, 7
    %v950 = vsub.s32 4, %v949
    %v951 = vrot.slane %v859, %v950
    %v952 = vmul.f32 %v40, 0.06181764
    %954 = vset.pattern.permute.xlu0 0
    %955 = vperm.xlu0 %954, %v952
    %v956 = vpop.permute.xlu0 %955
    %v958 = vmul.f32 %v956, %v947
    %v959 = vmul.f32 %v956, %v951
    %v960 = vsub.f32 %v942, %v958
    %v961 = vsub.f32 %v943, %v959
    %v962 = vlaneseq
    %v963 = vshrl.u32 %v962, 7
    %v964 = vsub.s32 5, %v963
    %v965 = vrot.slane %v858, %v964
    %v966 = vlaneseq
    %v967 = vshrl.u32 %v966, 7
    %v968 = vsub.s32 5, %v967
    %v969 = vrot.slane %v859, %v968
    %v970 = vmul.f32 %v42, 0.06181764
    %972 = vset.pattern.permute.xlu0 0
    %973 = vperm.xlu0 %972, %v970
    %v974 = vpop.permute.xlu0 %973
    %v976 = vmul.f32 %v974, %v965
    %v977 = vmul.f32 %v974, %v969
    %v978 = vsub.f32 %v960, %v976
    %v979 = vsub.f32 %v961, %v977
    %v980 = vlaneseq
    %v981 = vshrl.u32 %v980, 7
    %v982 = vsub.s32 6, %v981
    %v983 = vrot.slane %v858, %v982
    %v984 = vlaneseq
    %v985 = vshrl.u32 %v984, 7
    %v986 = vsub.s32 6, %v985
    %v987 = vrot.slane %v859, %v986
    %v988 = vmul.f32 %v44, 0.06181764
    %990 = vset.pattern.permute.xlu0 0
    %991 = vperm.xlu0 %990, %v988
    %v992 = vpop.permute.xlu0 %991
    %v994 = vmul.f32 %v992, %v983
    %v995 = vmul.f32 %v992, %v987
    %v996 = vsub.f32 %v978, %v994
    %v997 = vsub.f32 %v979, %v995
    %v998 = vlaneseq
    %v999 = vshrl.u32 %v998, 7
    %v1000 = vsub.s32 7, %v999
    %v1001 = vrot.slane %v858, %v1000
    %v1002 = vlaneseq
    %v1003 = vshrl.u32 %v1002, 7
    %v1004 = vsub.s32 7, %v1003
    %v1005 = vrot.slane %v859, %v1004
    %v1006 = vmul.f32 %v46, 0.06181764
    %1008 = vset.pattern.permute.xlu0 0
    %1009 = vperm.xlu0 %1008, %v1006
    %v1010 = vpop.permute.xlu0 %1009
    %v1012 = vmul.f32 %v1010, %v1001
    %v1013 = vmul.f32 %v1010, %v1005
    %v1014 = vsub.f32 %v996, %v1012
    %v1015 = vsub.f32 %v997, %v1013
    %s1016 = scalar_lea.vmem %s3, 80
    %v1017 = vld [vmem:[%s1016] sm:$0xff]
    %v1018 = vld [vmem:[%s1016 + $0x8] sm:$0xff]
    %v1019 = vmul.f32 %v1017, 0.07606389
    %v1020 = vmul.f32 %v1018, 0.07606389
    %v1021 = vadd.f32 %v1014, %v1019
    %v1022 = vadd.f32 %v1015, %v1020
    %v1023 = vmul.f32 %v1021, 1.0014747
    %v1024 = vmul.f32 %v1022, 1.0014747
    %s1025 = scalar_lea.vmem %s2, 48
    %v1026 = vld [vmem:[%s1025] sm:$0xff]
    %v1027 = vmul.f32 %v1026, 0.053430516
    %1029 = vset.pattern.permute.xlu0 0
    %1030 = vperm.xlu0 %1029, %v1027
    %v1031 = vpop.permute.xlu0 %1030
    %v1033 = vsub.f32 %v1023, %v1031
    %v1034 = vsub.f32 %v1024, %v1031
    %v1035 = vlaneseq
    %v1036 = vshrl.u32 %v1035, 7
    %v1037 = vsub.s32 0, %v1036
    %v1038 = vrot.slane %v1021, %v1037
    %v1039 = vlaneseq
    %v1040 = vshrl.u32 %v1039, 7
    %v1041 = vsub.s32 0, %v1040
    %v1042 = vrot.slane %v1022, %v1041
    %v1043 = vmul.f32 %v32, 0.053430516
    %1045 = vset.pattern.permute.xlu0 0
    %1046 = vperm.xlu0 %1045, %v1043
    %v1047 = vpop.permute.xlu0 %1046
    %v1049 = vmul.f32 %v1047, %v1038
    %v1050 = vmul.f32 %v1047, %v1042
    %v1051 = vsub.f32 %v1033, %v1049
    %v1052 = vsub.f32 %v1034, %v1050
    %v1053 = vlaneseq
    %v1054 = vshrl.u32 %v1053, 7
    %v1055 = vsub.s32 1, %v1054
    %v1056 = vrot.slane %v1021, %v1055
    %v1057 = vlaneseq
    %v1058 = vshrl.u32 %v1057, 7
    %v1059 = vsub.s32 1, %v1058
    %v1060 = vrot.slane %v1022, %v1059
    %v1061 = vmul.f32 %v34, 0.053430516
    %1063 = vset.pattern.permute.xlu0 0
    %1064 = vperm.xlu0 %1063, %v1061
    %v1065 = vpop.permute.xlu0 %1064
    %v1067 = vmul.f32 %v1065, %v1056
    %v1068 = vmul.f32 %v1065, %v1060
    %v1069 = vsub.f32 %v1051, %v1067
    %v1070 = vsub.f32 %v1052, %v1068
    %v1071 = vlaneseq
    %v1072 = vshrl.u32 %v1071, 7
    %v1073 = vsub.s32 2, %v1072
    %v1074 = vrot.slane %v1021, %v1073
    %v1075 = vlaneseq
    %v1076 = vshrl.u32 %v1075, 7
    %v1077 = vsub.s32 2, %v1076
    %v1078 = vrot.slane %v1022, %v1077
    %v1079 = vmul.f32 %v36, 0.053430516
    %1081 = vset.pattern.permute.xlu0 0
    %1082 = vperm.xlu0 %1081, %v1079
    %v1083 = vpop.permute.xlu0 %1082
    %v1085 = vmul.f32 %v1083, %v1074
    %v1086 = vmul.f32 %v1083, %v1078
    %v1087 = vsub.f32 %v1069, %v1085
    %v1088 = vsub.f32 %v1070, %v1086
    %v1089 = vlaneseq
    %v1090 = vshrl.u32 %v1089, 7
    %v1091 = vsub.s32 3, %v1090
    %v1092 = vrot.slane %v1021, %v1091
    %v1093 = vlaneseq
    %v1094 = vshrl.u32 %v1093, 7
    %v1095 = vsub.s32 3, %v1094
    %v1096 = vrot.slane %v1022, %v1095
    %v1097 = vmul.f32 %v38, 0.053430516
    %1099 = vset.pattern.permute.xlu0 0
    %1100 = vperm.xlu0 %1099, %v1097
    %v1101 = vpop.permute.xlu0 %1100
    %v1103 = vmul.f32 %v1101, %v1092
    %v1104 = vmul.f32 %v1101, %v1096
    %v1105 = vsub.f32 %v1087, %v1103
    %v1106 = vsub.f32 %v1088, %v1104
    %v1107 = vlaneseq
    %v1108 = vshrl.u32 %v1107, 7
    %v1109 = vsub.s32 4, %v1108
    %v1110 = vrot.slane %v1021, %v1109
    %v1111 = vlaneseq
    %v1112 = vshrl.u32 %v1111, 7
    %v1113 = vsub.s32 4, %v1112
    %v1114 = vrot.slane %v1022, %v1113
    %v1115 = vmul.f32 %v40, 0.053430516
    %1117 = vset.pattern.permute.xlu0 0
    %1118 = vperm.xlu0 %1117, %v1115
    %v1119 = vpop.permute.xlu0 %1118
    %v1121 = vmul.f32 %v1119, %v1110
    %v1122 = vmul.f32 %v1119, %v1114
    %v1123 = vsub.f32 %v1105, %v1121
    %v1124 = vsub.f32 %v1106, %v1122
    %v1125 = vlaneseq
    %v1126 = vshrl.u32 %v1125, 7
    %v1127 = vsub.s32 5, %v1126
    %v1128 = vrot.slane %v1021, %v1127
    %v1129 = vlaneseq
    %v1130 = vshrl.u32 %v1129, 7
    %v1131 = vsub.s32 5, %v1130
    %v1132 = vrot.slane %v1022, %v1131
    %v1133 = vmul.f32 %v42, 0.053430516
    %1135 = vset.pattern.permute.xlu0 0
    %1136 = vperm.xlu0 %1135, %v1133
    %v1137 = vpop.permute.xlu0 %1136
    %v1139 = vmul.f32 %v1137, %v1128
    %v1140 = vmul.f32 %v1137, %v1132
    %v1141 = vsub.f32 %v1123, %v1139
    %v1142 = vsub.f32 %v1124, %v1140
    %v1143 = vlaneseq
    %v1144 = vshrl.u32 %v1143, 7
    %v1145 = vsub.s32 6, %v1144
    %v1146 = vrot.slane %v1021, %v1145
    %v1147 = vlaneseq
    %v1148 = vshrl.u32 %v1147, 7
    %v1149 = vsub.s32 6, %v1148
    %v1150 = vrot.slane %v1022, %v1149
    %v1151 = vmul.f32 %v44, 0.053430516
    %1153 = vset.pattern.permute.xlu0 0
    %1154 = vperm.xlu0 %1153, %v1151
    %v1155 = vpop.permute.xlu0 %1154
    %v1157 = vmul.f32 %v1155, %v1146
    %v1158 = vmul.f32 %v1155, %v1150
    %v1159 = vsub.f32 %v1141, %v1157
    %v1160 = vsub.f32 %v1142, %v1158
    %v1161 = vlaneseq
    %v1162 = vshrl.u32 %v1161, 7
    %v1163 = vsub.s32 7, %v1162
    %v1164 = vrot.slane %v1021, %v1163
    %v1165 = vlaneseq
    %v1166 = vshrl.u32 %v1165, 7
    %v1167 = vsub.s32 7, %v1166
    %v1168 = vrot.slane %v1022, %v1167
    %v1169 = vmul.f32 %v46, 0.053430516
    %1171 = vset.pattern.permute.xlu0 0
    %1172 = vperm.xlu0 %1171, %v1169
    %v1173 = vpop.permute.xlu0 %1172
    %v1175 = vmul.f32 %v1173, %v1164
    %v1176 = vmul.f32 %v1173, %v1168
    %v1177 = vsub.f32 %v1159, %v1175
    %v1178 = vsub.f32 %v1160, %v1176
    %s1179 = scalar_lea.vmem %s3, 96
    %v1180 = vld [vmem:[%s1179] sm:$0xff]
    %v1181 = vld [vmem:[%s1179 + $0x8] sm:$0xff]
    %v1182 = vmul.f32 %v1180, 0.054248106
    %v1183 = vmul.f32 %v1181, 0.054248106
    %v1184 = vadd.f32 %v1177, %v1182
    %v1185 = vadd.f32 %v1178, %v1183
    %v1186 = vmul.f32 %v1184, 1.00005
    %v1187 = vmul.f32 %v1185, 1.00005
    %s1188 = scalar_lea.vmem %s2, 56
    %v1189 = vld [vmem:[%s1188] sm:$0xff]
    %v1190 = vmul.f32 %v1189, 0.0100005
    %1192 = vset.pattern.permute.xlu0 0
    %1193 = vperm.xlu0 %1192, %v1190
    %v1194 = vpop.permute.xlu0 %1193
    %v1196 = vsub.f32 %v1186, %v1194
    %v1197 = vsub.f32 %v1187, %v1194
    %v1198 = vlaneseq
    %v1199 = vshrl.u32 %v1198, 7
    %v1200 = vsub.s32 0, %v1199
    %v1201 = vrot.slane %v1184, %v1200
    %v1202 = vlaneseq
    %v1203 = vshrl.u32 %v1202, 7
    %v1204 = vsub.s32 0, %v1203
    %v1205 = vrot.slane %v1185, %v1204
    %v1206 = vmul.f32 %v32, 0.0100005
    %1208 = vset.pattern.permute.xlu0 0
    %1209 = vperm.xlu0 %1208, %v1206
    %v1210 = vpop.permute.xlu0 %1209
    %v1212 = vmul.f32 %v1210, %v1201
    %v1213 = vmul.f32 %v1210, %v1205
    %v1214 = vsub.f32 %v1196, %v1212
    %v1215 = vsub.f32 %v1197, %v1213
    %v1216 = vlaneseq
    %v1217 = vshrl.u32 %v1216, 7
    %v1218 = vsub.s32 1, %v1217
    %v1219 = vrot.slane %v1184, %v1218
    %v1220 = vlaneseq
    %v1221 = vshrl.u32 %v1220, 7
    %v1222 = vsub.s32 1, %v1221
    %v1223 = vrot.slane %v1185, %v1222
    %v1224 = vmul.f32 %v34, 0.0100005
    %1226 = vset.pattern.permute.xlu0 0
    %1227 = vperm.xlu0 %1226, %v1224
    %v1228 = vpop.permute.xlu0 %1227
    %v1230 = vmul.f32 %v1228, %v1219
    %v1231 = vmul.f32 %v1228, %v1223
    %v1232 = vsub.f32 %v1214, %v1230
    %v1233 = vsub.f32 %v1215, %v1231
    %v1234 = vlaneseq
    %v1235 = vshrl.u32 %v1234, 7
    %v1236 = vsub.s32 2, %v1235
    %v1237 = vrot.slane %v1184, %v1236
    %v1238 = vlaneseq
    %v1239 = vshrl.u32 %v1238, 7
    %v1240 = vsub.s32 2, %v1239
    %v1241 = vrot.slane %v1185, %v1240
    %v1242 = vmul.f32 %v36, 0.0100005
    %1244 = vset.pattern.permute.xlu0 0
    %1245 = vperm.xlu0 %1244, %v1242
    %v1246 = vpop.permute.xlu0 %1245
    %v1248 = vmul.f32 %v1246, %v1237
    %v1249 = vmul.f32 %v1246, %v1241
    %v1250 = vsub.f32 %v1232, %v1248
    %v1251 = vsub.f32 %v1233, %v1249
    %v1252 = vlaneseq
    %v1253 = vshrl.u32 %v1252, 7
    %v1254 = vsub.s32 3, %v1253
    %v1255 = vrot.slane %v1184, %v1254
    %v1256 = vlaneseq
    %v1257 = vshrl.u32 %v1256, 7
    %v1258 = vsub.s32 3, %v1257
    %v1259 = vrot.slane %v1185, %v1258
    %v1260 = vmul.f32 %v38, 0.0100005
    %1262 = vset.pattern.permute.xlu0 0
    %1263 = vperm.xlu0 %1262, %v1260
    %v1264 = vpop.permute.xlu0 %1263
    %v1266 = vmul.f32 %v1264, %v1255
    %v1267 = vmul.f32 %v1264, %v1259
    %v1268 = vsub.f32 %v1250, %v1266
    %v1269 = vsub.f32 %v1251, %v1267
    %v1270 = vlaneseq
    %v1271 = vshrl.u32 %v1270, 7
    %v1272 = vsub.s32 4, %v1271
    %v1273 = vrot.slane %v1184, %v1272
    %v1274 = vlaneseq
    %v1275 = vshrl.u32 %v1274, 7
    %v1276 = vsub.s32 4, %v1275
    %v1277 = vrot.slane %v1185, %v1276
    %v1278 = vmul.f32 %v40, 0.0100005
    %1280 = vset.pattern.permute.xlu0 0
    %1281 = vperm.xlu0 %1280, %v1278
    %v1282 = vpop.permute.xlu0 %1281
    %v1284 = vmul.f32 %v1282, %v1273
    %v1285 = vmul.f32 %v1282, %v1277
    %v1286 = vsub.f32 %v1268, %v1284
    %v1287 = vsub.f32 %v1269, %v1285
    %v1288 = vlaneseq
    %v1289 = vshrl.u32 %v1288, 7
    %v1290 = vsub.s32 5, %v1289
    %v1291 = vrot.slane %v1184, %v1290
    %v1292 = vlaneseq
    %v1293 = vshrl.u32 %v1292, 7
    %v1294 = vsub.s32 5, %v1293
    %v1295 = vrot.slane %v1185, %v1294
    %v1296 = vmul.f32 %v42, 0.0100005
    %1298 = vset.pattern.permute.xlu0 0
    %1299 = vperm.xlu0 %1298, %v1296
    %v1300 = vpop.permute.xlu0 %1299
    %v1302 = vmul.f32 %v1300, %v1291
    %v1303 = vmul.f32 %v1300, %v1295
    %v1304 = vsub.f32 %v1286, %v1302
    %v1305 = vsub.f32 %v1287, %v1303
    %v1306 = vlaneseq
    %v1307 = vshrl.u32 %v1306, 7
    %v1308 = vsub.s32 6, %v1307
    %v1309 = vrot.slane %v1184, %v1308
    %v1310 = vlaneseq
    %v1311 = vshrl.u32 %v1310, 7
    %v1312 = vsub.s32 6, %v1311
    %v1313 = vrot.slane %v1185, %v1312
    %v1314 = vmul.f32 %v44, 0.0100005
    %1316 = vset.pattern.permute.xlu0 0
    %1317 = vperm.xlu0 %1316, %v1314
    %v1318 = vpop.permute.xlu0 %1317
    %v1320 = vmul.f32 %v1318, %v1309
    %v1321 = vmul.f32 %v1318, %v1313
    %v1322 = vsub.f32 %v1304, %v1320
    %v1323 = vsub.f32 %v1305, %v1321
    %v1324 = vlaneseq
    %v1325 = vshrl.u32 %v1324, 7
    %v1326 = vsub.s32 7, %v1325
    %v1327 = vrot.slane %v1184, %v1326
    %v1328 = vlaneseq
    %v1329 = vshrl.u32 %v1328, 7
    %v1330 = vsub.s32 7, %v1329
    %v1331 = vrot.slane %v1185, %v1330
    %v1332 = vmul.f32 %v46, 0.0100005
    %1334 = vset.pattern.permute.xlu0 0
    %1335 = vperm.xlu0 %1334, %v1332
    %v1336 = vpop.permute.xlu0 %1335
    %v1338 = vmul.f32 %v1336, %v1327
    %v1339 = vmul.f32 %v1336, %v1331
    %v1340 = vsub.f32 %v1322, %v1338
    %v1341 = vsub.f32 %v1323, %v1339
    %v1342 = vmax.f32 %v1340, -1.0
    %v1343 = vmax.f32 %v1341, -1.0
    %v1344 = vmin.f32 %v1342, 1.0
    %v1345 = vmin.f32 %v1343, 1.0
    %1346 = vst [vmem:[#allocation5] sm:$0xff] %v1344
    %1347 = vst [vmem:[#allocation5 + $0x8] sm:$0xff] %v1345
    // Predicated region
    $region22: #{run_sampler.1} parent=1 // pred_check
      _
    $region23: #{run_sampler.1} parent=1 // pred_check_branch
      %1349 = sbr.rel (0) target = $region25
    $region24: #{run_sampler.1} parent=1 // pred_region
      %s1351 = ssub.s32 256, 256
      %1352 = vsyncadd [#allocation4], %s1351
      %s1354 = sshll.u32 [#allocation5], 4
      %s1355 = int_to_ptr.vmem [resolvable:$true] %s1354
      %1357 = dma.vmem_to_hbm [thread:$0]  %s1355, 256, %s4, [#allocation4]
    $region25: #{run_sampler.1} parent=1 // pred_fallthru
      _
    // Predicated region
    $region26: #{run_sampler.1} parent=1 // pred_check
      _
    $region27: #{run_sampler.1} parent=1 // pred_check_branch
      %1359 = sbr.rel (0) target = $region29
    $region28: #{run_sampler.1} parent=1 // pred_region
      %1360 = dma.done [#allocation4], 256
    $region29: #{run_sampler.1} parent=1 // pred_fallthru
      _
    %1361 = vsyncpa [#allocation3], 1
    %1362 = vsyncpa [#allocation4], 1

</llo_original>
